<compile_context>
chip_gen: v7x
topology: tpu7x:2x2x1
jax: 0.10.0
libtpu: 0.0.40
codegen_flags: <defaults>
</compile_context>

<pallas_src>
import jax
import jax.numpy as jnp
from jax.experimental import pallas as pl
from jax.experimental.pallas import tpu as pltpu


# ----------------------------------------------------------------------------- helpers

def _round_up(x, m):
    return ((x + m - 1) // m) * m


def _pad_last(a, target):
    pad = target - a.shape[-1]
    if pad == 0:
        return a
    return jnp.pad(a, [(0, 0)] * (a.ndim - 1) + [(0, pad)])


def _hw_info():
    """(num_tensorcores_per_chip, vmem_capacity_bytes) with conservative fallbacks."""
    vmem = 64 * 1024 * 1024            # conservative (v7x per-TC physical VMEM)
    try:
        vmem = int(pltpu.get_tpu_info().vmem_capacity_bytes)
    except Exception:
        pass
    kind = ""
    try:
        kind = jax.devices()[0].device_kind.lower()
    except Exception:
        pass
    # v7x / v5p / v4 expose two TensorCores per chip (megacore); v5e / v6e have one.
    cores = 2 if any(t in kind for t in ("v7", "7x", "v5p", "v4")) else 1
    return cores, vmem


def _block_vmem_bytes(Bt, O, Dp, L, io_itemsize, w_itemsize):
    """Rough per-grid-step VMEM footprint (double-buffered streams + resident weights)."""
    x_blk = Bt * O * Dp * 4                 # f32 carried state
    rs_blk = Bt * O * Dp * io_itemsize
    a_blk = Bt * O * O * io_itemsize
    out_blk = Bt * O * Dp * 4
    streamed = 2 * (x_blk + rs_blk + a_blk + out_blk)        # double-buffered
    weights = 2 * L * Dp * Dp * w_itemsize + 2 * L * Dp * 4  # single-buffered (Buffered(1))
    live = 6 * Bt * O * Dp * 4                               # in-kernel temporaries (z, bp, x*rs, ...)
    return streamed + weights + live


def _pick_batch_block(B, O, Dp, L, io_itemsize, w_itemsize, cores, budget):
    divisors = [d for d in range(1, B + 1) if B % d == 0]
    fits = [d for d in divisors
            if _block_vmem_bytes(d, O, Dp, L, io_itemsize, w_itemsize) <= budget]
    if not fits:
        return 1
    if cores == 1:
        # Single TensorCore: no core-parallel reason to split; fewest steps that fit VMEM.
        return max(fits)
    # Multi-core chip: give every core work, and >=3 steps per core (when the batch
    # allows) so BlockSpec double-buffering actually has DMA to hide behind compute.
    for target in (3 * cores, cores):
        cand = [d for d in fits if B // d >= target]
        if cand:
            return max(cand)
    return max(fits)


# ----------------------------------------------------------------------------- kernel

def _make_gcn_kernel(L, O, Dp, mxu_dtype, vpu_aggregate, unroll_layers):
    """All GCN layers for one batch block, fully fused; weights stay VMEM-resident."""

    def kernel(x_ref, rs_ref, a_ref, w1_ref, b1_ref, w2_ref, b2_ref, out_ref):
        Bt = x_ref.shape[0]
        M = Bt * O

        # Collapse (Bt, O, Dp) -> (Bt*O, Dp): one big-M matmul per dense linear
        # instead of Bt tiny batched matmuls (fills MXU rows).
        x = x_ref[...].reshape(M, Dp)                        # f32 carried state
        rs = rs_ref[...].astype(jnp.float32).reshape(M, Dp)  # rel_sum (layer-invariant)
        a = a_ref[...]                                       # (Bt, O, O), already / denom

        def one_layer(l, x):
            # self-linear:  h = x @ W1^T + b1
            h = jnp.dot(x.astype(mxu_dtype), w1_ref[l],
                        preferred_element_type=jnp.float32) + b1_ref[l]
            # relation-linear (linearity hoist):  z = (x * rel_sum) @ W2^T + O*b2
            z = jnp.dot((x * rs).astype(mxu_dtype), w2_ref[l],
                        preferred_element_type=jnp.float32) + b2_ref[l]
            z3 = z.reshape(Bt, O, Dp)

            if vpu_aggregate:
                # O is tiny: a batched (O x O) @ (O x Dp) fills <1% of the MXU, so do
                # the normalized-adjacency aggregation on the VPU instead.
                bp3 = jnp.zeros((Bt, O, Dp), jnp.float32)
                for j in range(O):
                    aj = a[:, :, j:j + 1].astype(jnp.float32)   # (Bt, O, 1)  lane-broadcast
                    zj = z3[:, j:j + 1, :]                      # (Bt, 1, Dp) sublane-broadcast
                    bp3 = bp3 + aj * zj
            else:
                bp3 = jax.lax.dot_general(
                    a.astype(mxu_dtype), z3.astype(mxu_dtype),
                    dimension_numbers=(((2,), (1,)), ((0,), (0,))),
                    preferred_element_type=jnp.float32)

            return jnp.tanh(h + bp3.reshape(M, Dp) + x)

        if unroll_layers:
            for l in range(L):                               # tiny depth: static unroll
                x = one_layer(l, x)
        else:
            # Larger depth: fori_loop bounds vreg live ranges (avoids spill pressure).
            x = jax.lax.fori_loop(0, L, lambda l, xc: one_layer(l, xc), x)

        out_ref[...] = x.reshape(Bt, O, Dp)

    return kernel


def gcn_fused(x_p, rs_p, a_norm, w1_all, b1_all, w2_all, b2_all, *, mxu_dtype):
    B, O, Dp = x_p.shape
    L = w1_all.shape[0]
    io_itemsize = rs_p.dtype.itemsize
    w_itemsize = w1_all.dtype.itemsize

    cores, vmem = _hw_info()
    budget = min(vmem // 2, 64 << 20)                        # halve for v7x's 64 MiB VMEM
    Bt = _pick_batch_block(B, O, Dp, L, io_itemsize, w_itemsize, cores, budget)
    grid_b = B // Bt
    need = _block_vmem_bytes(Bt, O, Dp, L, io_itemsize, w_itemsize)
    vmem_limit = int(min(max(budget, need + (4 << 20)), max(vmem - (8 << 20), 16 << 20)))

    kernel = _make_gcn_kernel(L=L, O=O, Dp=Dp, mxu_dtype=mxu_dtype,
                              vpu_aggregate=(O <= 16), unroll_layers=(L <= 4))

    flops = L * (4 * B * O * Dp * Dp + 2 * B * O * O * Dp + 6 * B * O * Dp)
    bytes_accessed = (sum(int(t.size) * t.dtype.itemsize
                          for t in (x_p, rs_p, a_norm, w1_all, b1_all, w2_all, b2_all))
                      + int(x_p.size) * 4)                   # + output
    cost = pl.CostEstimate(flops=flops, transcendentals=L * B * O * Dp,
                           bytes_accessed=bytes_accessed)

    batch_idx = lambda b: (b, 0, 0)
    const_idx = lambda b: (0, 0, 0)

    def _run(single_buffer_weights):
        if single_buffer_weights:
            # Weight/bias blocks never change across the grid -> single-buffer them
            # to buy back VMEM headroom (matters on v7x / at large D).
            wkw = dict(pipeline_mode=pl.Buffered(1))
        else:
            wkw = {}
        in_specs = [
            pl.BlockSpec((Bt, O, Dp), batch_idx),            # x
            pl.BlockSpec((Bt, O, Dp), batch_idx),            # rel_sum
            pl.BlockSpec((Bt, O, O), batch_idx),             # A / denom
            pl.BlockSpec((L, Dp, Dp), const_idx, **wkw),     # W1^T (stacked, padded)
            pl.BlockSpec((L, 1, Dp), const_idx, **wkw),      # b1
            pl.BlockSpec((L, Dp, Dp), const_idx, **wkw),     # W2^T
            pl.BlockSpec((L, 1, Dp), const_idx, **wkw),      # O * b2
        ]
        return pl.pallas_call(
            kernel,
            out_shape=jax.ShapeDtypeStruct((B, O, Dp), jnp.float32),
            grid_spec=pltpu.PrefetchScalarGridSpec(
                num_scalar_prefetch=0,
                grid=(grid_b,),
                in_specs=in_specs,
                out_specs=pl.BlockSpec((Bt, O, Dp), batch_idx),
            ),
            compiler_params=pltpu.CompilerParams(
                dimension_semantics=("parallel",),
                vmem_limit_bytes=vmem_limit),
            cost_estimate=cost,
        )(x_p, rs_p, a_norm, w1_all, b1_all, w2_all, b2_all)

    try:
        return _run(True)
    except Exception:
        # Fallback if this jax/libtpu build rejects pipeline_mode / Buffered(1).
        return _run(False)


# ----------------------------------------------------------------------------- wrapper

def gcn_forward(obj_img_feats, obj_wrds, obj_rels, params, use_blind=False,
                mxu_dtype=jnp.float32):
    obj_name_emb = params["obj_name_embedding"]   # (max_objs, D)
    rel_emb = params["relation_embedding"]        # (max_rels, D)
    B, O = obj_wrds.shape
    D = obj_name_emb.shape[1]
    max_rels = rel_emb.shape[0]
    Dp = _round_up(D, 128)                        # lane-dense feature dim
    io_dtype = mxu_dtype if jnp.dtype(mxu_dtype).itemsize < 4 else jnp.float32

    # Object-name embedding gather (plain JAX: a dense-tile kernel gains nothing here).
    x = obj_name_emb[obj_wrds]                    # (B, O, D)

    # rel_sum[b, j] = sum_i rel_emb[obj_rels[b, i, j]] via one-hot counts:
    # never materializes the (B, O, O, D) gathered tensor in HBM.
    rels_by_dst = jnp.swapaxes(obj_rels, 1, 2).reshape(B * O, O)   # rows (b, j), cols i
    counts = jnp.zeros((B * O, max_rels), jnp.float32)
    counts = counts.at[jnp.arange(B * O)[:, None], rels_by_dst].add(1.0)
    rel_sum = (counts @ rel_emb).reshape(B, O, D)

    # Fold 1/denom into A:  bp/denom == (A/denom) @ z.
    A = (obj_rels > 0).astype(jnp.float32)
    denom = jnp.sum(A, axis=2, keepdims=True)
    denom = jnp.where(denom == 0, 1.0, denom)
    A_norm = (A / denom).astype(io_dtype)         # (B, O, O)

    # Stack + pad layer weights; nn.Linear is y = x @ W^T + b, so pass W^T.
    layers = params["layers"]
    w1_all = jnp.stack([w1.T for (w1, _, _, _) in layers])          # (L, D, D)
    w2_all = jnp.stack([w2.T for (_, _, w2, _) in layers])
    b1_all = jnp.stack([b1 for (_, b1, _, _) in layers])[:, None, :]            # (L, 1, D)
    b2_all = jnp.stack([b2 for (_, _, _, b2) in layers])[:, None, :] * float(O)  # O*b2
    P = Dp - D
    if P:
        w1_all = jnp.pad(w1_all, ((0, 0), (0, P), (0, P)))
        w2_all = jnp.pad(w2_all, ((0, 0), (0, P), (0, P)))
        b1_all = jnp.pad(b1_all, ((0, 0), (0, 0), (0, P)))
        b2_all = jnp.pad(b2_all, ((0, 0), (0, 0), (0, P)))
    w1_all = w1_all.astype(mxu_dtype)
    w2_all = w2_all.astype(mxu_dtype)

    x_p = _pad_last(x, Dp)                                    # padded lanes stay 0 forever
    rs_p = _pad_last(rel_sum, Dp).astype(io_dtype)

    x_out = gcn_fused(x_p, rs_p, A_norm, w1_all, b1_all, w2_all, b2_all,
                      mxu_dtype=mxu_dtype)[:, :, :D]

    if use_blind:
        return x_out
    return jnp.concatenate([x_out, obj_img_feats], axis=2)


# ----------------------------------------------------------------------------- reference

def gcn_forward_ref(obj_img_feats, obj_wrds, obj_rels, params, use_blind=False):
    """Pure-JAX reference following the PyTorch op order."""
    obj_name_emb = params["obj_name_embedding"]
    rel_emb = params["relation_embedding"]
    B, O = obj_wrds.shape
    D = obj_name_emb.shape[1]

    x = obj_name_emb[obj_wrds]
    rel = rel_emb[obj_rels]
    A = (obj_rels > 0).astype(jnp.float32)
    denom = jnp.sum(A, axis=2)
    denom = jnp.where(denom == 0, 1.0, denom)[..., None]

    for (w1, b1, w2, b2) in params["layers"]:
        xr = jnp.broadcast_to(x[:, None, :, :], (B, O, O, D))   # xr[b,i,j] = x[b,j]
        y = jnp.einsum('bijd,ed->bije', xr * rel, w2) + b2
        y = jnp.transpose(y, (0, 2, 1, 3)).reshape(B, O, O * D)
        bp = jnp.einsum('bpj,bjk->bpk', A, y).reshape(B, O, O, D).sum(axis=2)
        x = jnp.tanh(x @ w1.T + b1 + bp / denom + x)

    if use_blind:
        return x
    return jnp.concatenate([x, obj_img_feats], axis=2)


def init_params(key, *, max_objs, max_rels, D, gcn_depth):
    keys = jax.random.split(key, 2 + 4 * gcn_depth)
    xavier_a = (6.0 / (D + D)) ** 0.5
    bias_a = 1.0 / (D ** 0.5)
    layers = []
    for i in range(gcn_depth):
        kw1, kb1, kw2, kb2 = keys[4 * i: 4 * i + 4]
        w1 = jax.random.uniform(kw1, (D, D), jnp.float32, -xavier_a, xavier_a)
        b1 = jax.random.uniform(kb1, (D,), jnp.float32, -bias_a, bias_a)
        w2 = jax.random.uniform(kw2, (D, D), jnp.float32, -xavier_a, xavier_a)
        b2 = jax.random.uniform(kb2, (D,), jnp.float32, -bias_a, bias_a)
        layers.append((w1, b1, w2, b2))
    return {
        "layers": layers,
        "relation_embedding": jax.random.normal(keys[-2], (max_rels, D), jnp.float32),
        "obj_name_embedding": jax.random.normal(keys[-1], (max_objs, D), jnp.float32),
    }


if __name__ == "__main__":
    B, O, D, F = 2, 8, 32, 16          # batch, objects, emb dim, img feat dim
    max_objs, max_rels, gcn_depth = 20, 10, 2
    use_blind = False

    key = jax.random.PRNGKey(0)
    k_params, k_feat, k_wrd, k_rel = jax.random.split(key, 4)

    params = init_params(k_params, max_objs=max_objs, max_rels=max_rels,
                         D=D, gcn_depth=gcn_depth)

    obj_img_feats = jax.random.normal(k_feat, (B, O, F), jnp.float32)
    obj_wrds = jax.random.randint(k_wrd, (B, O), 0, max_objs, dtype=jnp.int32)
    obj_rels = jax.random.randint(k_rel, (B, O, O), 0, max_rels, dtype=jnp.int32)

    ref = jax.block_until_ready(
        gcn_forward_ref(obj_img_feats, obj_wrds, obj_rels, params, use_blind=use_blind))

    # f32 MXU operands: strict parity with the PyTorch-op-order reference.
    out = jax.block_until_ready(
        gcn_forward(obj_img_feats, obj_wrds, obj_rels, params,
                    use_blind=use_blind, mxu_dtype=jnp.float32))
    assert out.shape == (B, O, D + F), out.shape
    assert jnp.allclose(out, ref, rtol=1e-4, atol=1e-4), \
        float(jnp.max(jnp.abs(out - ref)))

    # bf16 MXU operands / f32 accumulation (the perf configuration): loose sanity bound
    # only, since the reference runs fully in f32.
    out_bf16 = jax.block_until_ready(
        gcn_forward(obj_img_feats, obj_wrds, obj_rels, params,
                    use_blind=use_blind, mxu_dtype=jnp.bfloat16))
    assert out_bf16.shape == (B, O, D + F), out_bf16.shape
    assert float(jnp.max(jnp.abs(out_bf16 - ref))) < 0.5

    print("KERNEL_OK")
</pallas_src>

<mosaic_0001>
module attributes {stable_mosaic.version = 11 : i64} {
  func.func @kernel(%arg0: i32, %arg1: memref<2x8x128xf32, #tpu.memory_space<vmem>>, %arg2: memref<2x8x128xf32, #tpu.memory_space<vmem>>, %arg3: memref<2x8x8xf32, #tpu.memory_space<vmem>>, %arg4: memref<2x128x128xf32, #tpu.memory_space<vmem>>, %arg5: memref<2x1x128xf32, #tpu.memory_space<vmem>>, %arg6: memref<2x128x128xf32, #tpu.memory_space<vmem>>, %arg7: memref<2x1x128xf32, #tpu.memory_space<vmem>>, %arg8: memref<2x8x128xf32, #tpu.memory_space<vmem>>) attributes {dimension_semantics = [#tpu.dimension_semantics<parallel>], iteration_bounds = array<i64: 1>, scalar_prefetch = 0 : i64, scratch_operands = 0 : i64, tpu.core_type = #tpu.core_type<tc>, window_params = [{transform_indices = @transform_0, window_bounds = array<i64: 2, 8, 128>}, {transform_indices = @transform_1, window_bounds = array<i64: 2, 8, 128>}, {transform_indices = @transform_2, window_bounds = array<i64: 2, 8, 8>}, {pipeline_mode = #tpu.pipeline_mode<synchronous>, transform_indices = @transform_3, window_bounds = array<i64: 2, 128, 128>}, {pipeline_mode = #tpu.pipeline_mode<synchronous>, transform_indices = @transform_4, window_bounds = array<i64: 2, 1, 128>}, {pipeline_mode = #tpu.pipeline_mode<synchronous>, transform_indices = @transform_5, window_bounds = array<i64: 2, 128, 128>}, {pipeline_mode = #tpu.pipeline_mode<synchronous>, transform_indices = @transform_6, window_bounds = array<i64: 2, 1, 128>}, {transform_indices = @transform_7, window_bounds = array<i64: 2, 8, 128>}]} {
    %c0 = arith.constant 0 : index
    %c0_0 = arith.constant 0 : index
    %c0_1 = arith.constant 0 : index
    %0 = vector.load %arg1[%c0, %c0_0, %c0_1] : memref<2x8x128xf32, #tpu.memory_space<vmem>>, vector<2x8x128xf32>
    %1 = vector.shape_cast %0 : vector<2x8x128xf32> to vector<16x128xf32>
    %c0_2 = arith.constant 0 : index
    %c0_3 = arith.constant 0 : index
    %c0_4 = arith.constant 0 : index
    %2 = vector.load %arg2[%c0_2, %c0_3, %c0_4] : memref<2x8x128xf32, #tpu.memory_space<vmem>>, vector<2x8x128xf32>
    %3 = vector.shape_cast %2 : vector<2x8x128xf32> to vector<16x128xf32>
    %c0_5 = arith.constant 0 : index
    %c0_6 = arith.constant 0 : index
    %c0_7 = arith.constant 0 : index
    %4 = vector.load %arg3[%c0_5, %c0_6, %c0_7] : memref<2x8x8xf32, #tpu.memory_space<vmem>>, vector<2x8x8xf32>
    %c0_8 = arith.constant 0 : index
    %c0_9 = arith.constant 0 : index
    %c0_10 = arith.constant 0 : index
    %5 = vector.load %arg4[%c0_8, %c0_9, %c0_10] : memref<2x128x128xf32, #tpu.memory_space<vmem>>, vector<1x128x128xf32>
    %6 = vector.shape_cast %5 : vector<1x128x128xf32> to vector<128x128xf32>
    %cst = arith.constant dense<0.000000e+00> : vector<16x128xf32>
    %7 = tpu.matmul %1, %6, %cst {dimension_numbers = #tpu.dot_dimension_numbers<[1], [0], [0], [1], [0, 0, 1, 1], [], []>} : vector<16x128xf32>, vector<128x128xf32>, vector<16x128xf32> -> vector<16x128xf32>
    %c0_11 = arith.constant 0 : index
    %c0_12 = arith.constant 0 : index
    %c0_13 = arith.constant 0 : index
    %8 = vector.load %arg5[%c0_11, %c0_12, %c0_13] : memref<2x1x128xf32, #tpu.memory_space<vmem>>, vector<1x1x128xf32>
    %9 = vector.shape_cast %8 : vector<1x1x128xf32> to vector<1x128xf32>
    %10 = vector.broadcast %9 : vector<1x128xf32> to vector<16x128xf32>
    %11 = arith.addf %7, %10 : vector<16x128xf32>
    %12 = arith.mulf %1, %3 : vector<16x128xf32>
    %c0_14 = arith.constant 0 : index
    %c0_15 = arith.constant 0 : index
    %c0_16 = arith.constant 0 : index
    %13 = vector.load %arg6[%c0_14, %c0_15, %c0_16] : memref<2x128x128xf32, #tpu.memory_space<vmem>>, vector<1x128x128xf32>
    %14 = vector.shape_cast %13 : vector<1x128x128xf32> to vector<128x128xf32>
    %cst_17 = arith.constant dense<0.000000e+00> : vector<16x128xf32>
    %15 = tpu.matmul %12, %14, %cst_17 {dimension_numbers = #tpu.dot_dimension_numbers<[1], [0], [0], [1], [0, 0, 1, 1], [], []>} : vector<16x128xf32>, vector<128x128xf32>, vector<16x128xf32> -> vector<16x128xf32>
    %c0_18 = arith.constant 0 : index
    %c0_19 = arith.constant 0 : index
    %c0_20 = arith.constant 0 : index
    %16 = vector.load %arg7[%c0_18, %c0_19, %c0_20] : memref<2x1x128xf32, #tpu.memory_space<vmem>>, vector<1x1x128xf32>
    %17 = vector.shape_cast %16 : vector<1x1x128xf32> to vector<1x128xf32>
    %18 = vector.broadcast %17 : vector<1x128xf32> to vector<16x128xf32>
    %19 = arith.addf %15, %18 : vector<16x128xf32>
    %20 = vector.shape_cast %19 : vector<16x128xf32> to vector<2x8x128xf32>
    %cst_21 = arith.constant 0.000000e+00 : f32
    %21 = vector.broadcast %cst_21 : f32 to vector<2x8x128xf32>
    %22 = vector.extract_strided_slice %4 {offsets = [0, 0, 0], sizes = [2, 8, 1], strides = [1, 1, 1]} : vector<2x8x8xf32> to vector<2x8x1xf32>
    %23 = vector.extract_strided_slice %20 {offsets = [0, 0, 0], sizes = [2, 1, 128], strides = [1, 1, 1]} : vector<2x8x128xf32> to vector<2x1x128xf32>
    %24 = vector.broadcast %22 : vector<2x8x1xf32> to vector<2x8x128xf32>
    %25 = vector.broadcast %23 : vector<2x1x128xf32> to vector<2x8x128xf32>
    %26 = arith.mulf %24, %25 : vector<2x8x128xf32>
    %27 = arith.addf %21, %26 : vector<2x8x128xf32>
    %28 = vector.extract_strided_slice %4 {offsets = [0, 0, 1], sizes = [2, 8, 1], strides = [1, 1, 1]} : vector<2x8x8xf32> to vector<2x8x1xf32>
    %29 = vector.extract_strided_slice %20 {offsets = [0, 1, 0], sizes = [2, 1, 128], strides = [1, 1, 1]} : vector<2x8x128xf32> to vector<2x1x128xf32>
    %30 = vector.broadcast %28 : vector<2x8x1xf32> to vector<2x8x128xf32>
    %31 = vector.broadcast %29 : vector<2x1x128xf32> to vector<2x8x128xf32>
    %32 = arith.mulf %30, %31 : vector<2x8x128xf32>
    %33 = arith.addf %27, %32 : vector<2x8x128xf32>
    %34 = vector.extract_strided_slice %4 {offsets = [0, 0, 2], sizes = [2, 8, 1], strides = [1, 1, 1]} : vector<2x8x8xf32> to vector<2x8x1xf32>
    %35 = vector.extract_strided_slice %20 {offsets = [0, 2, 0], sizes = [2, 1, 128], strides = [1, 1, 1]} : vector<2x8x128xf32> to vector<2x1x128xf32>
    %36 = vector.broadcast %34 : vector<2x8x1xf32> to vector<2x8x128xf32>
    %37 = vector.broadcast %35 : vector<2x1x128xf32> to vector<2x8x128xf32>
    %38 = arith.mulf %36, %37 : vector<2x8x128xf32>
    %39 = arith.addf %33, %38 : vector<2x8x128xf32>
    %40 = vector.extract_strided_slice %4 {offsets = [0, 0, 3], sizes = [2, 8, 1], strides = [1, 1, 1]} : vector<2x8x8xf32> to vector<2x8x1xf32>
    %41 = vector.extract_strided_slice %20 {offsets = [0, 3, 0], sizes = [2, 1, 128], strides = [1, 1, 1]} : vector<2x8x128xf32> to vector<2x1x128xf32>
    %42 = vector.broadcast %40 : vector<2x8x1xf32> to vector<2x8x128xf32>
    %43 = vector.broadcast %41 : vector<2x1x128xf32> to vector<2x8x128xf32>
    %44 = arith.mulf %42, %43 : vector<2x8x128xf32>
    %45 = arith.addf %39, %44 : vector<2x8x128xf32>
    %46 = vector.extract_strided_slice %4 {offsets = [0, 0, 4], sizes = [2, 8, 1], strides = [1, 1, 1]} : vector<2x8x8xf32> to vector<2x8x1xf32>
    %47 = vector.extract_strided_slice %20 {offsets = [0, 4, 0], sizes = [2, 1, 128], strides = [1, 1, 1]} : vector<2x8x128xf32> to vector<2x1x128xf32>
    %48 = vector.broadcast %46 : vector<2x8x1xf32> to vector<2x8x128xf32>
    %49 = vector.broadcast %47 : vector<2x1x128xf32> to vector<2x8x128xf32>
    %50 = arith.mulf %48, %49 : vector<2x8x128xf32>
    %51 = arith.addf %45, %50 : vector<2x8x128xf32>
    %52 = vector.extract_strided_slice %4 {offsets = [0, 0, 5], sizes = [2, 8, 1], strides = [1, 1, 1]} : vector<2x8x8xf32> to vector<2x8x1xf32>
    %53 = vector.extract_strided_slice %20 {offsets = [0, 5, 0], sizes = [2, 1, 128], strides = [1, 1, 1]} : vector<2x8x128xf32> to vector<2x1x128xf32>
    %54 = vector.broadcast %52 : vector<2x8x1xf32> to vector<2x8x128xf32>
    %55 = vector.broadcast %53 : vector<2x1x128xf32> to vector<2x8x128xf32>
    %56 = arith.mulf %54, %55 : vector<2x8x128xf32>
    %57 = arith.addf %51, %56 : vector<2x8x128xf32>
    %58 = vector.extract_strided_slice %4 {offsets = [0, 0, 6], sizes = [2, 8, 1], strides = [1, 1, 1]} : vector<2x8x8xf32> to vector<2x8x1xf32>
    %59 = vector.extract_strided_slice %20 {offsets = [0, 6, 0], sizes = [2, 1, 128], strides = [1, 1, 1]} : vector<2x8x128xf32> to vector<2x1x128xf32>
    %60 = vector.broadcast %58 : vector<2x8x1xf32> to vector<2x8x128xf32>
    %61 = vector.broadcast %59 : vector<2x1x128xf32> to vector<2x8x128xf32>
    %62 = arith.mulf %60, %61 : vector<2x8x128xf32>
    %63 = arith.addf %57, %62 : vector<2x8x128xf32>
    %64 = vector.extract_strided_slice %4 {offsets = [0, 0, 7], sizes = [2, 8, 1], strides = [1, 1, 1]} : vector<2x8x8xf32> to vector<2x8x1xf32>
    %65 = vector.extract_strided_slice %20 {offsets = [0, 7, 0], sizes = [2, 1, 128], strides = [1, 1, 1]} : vector<2x8x128xf32> to vector<2x1x128xf32>
    %66 = vector.broadcast %64 : vector<2x8x1xf32> to vector<2x8x128xf32>
    %67 = vector.broadcast %65 : vector<2x1x128xf32> to vector<2x8x128xf32>
    %68 = arith.mulf %66, %67 : vector<2x8x128xf32>
    %69 = arith.addf %63, %68 : vector<2x8x128xf32>
    %70 = vector.shape_cast %69 : vector<2x8x128xf32> to vector<16x128xf32>
    %71 = arith.addf %11, %70 : vector<16x128xf32>
    %72 = arith.addf %71, %1 : vector<16x128xf32>
    %73 = math.tanh %72 : vector<16x128xf32>
    %c1 = arith.constant 1 : index
    %c0_22 = arith.constant 0 : index
    %c0_23 = arith.constant 0 : index
    %74 = vector.load %arg4[%c1, %c0_22, %c0_23] : memref<2x128x128xf32, #tpu.memory_space<vmem>>, vector<1x128x128xf32>
    %75 = vector.shape_cast %74 : vector<1x128x128xf32> to vector<128x128xf32>
    %cst_24 = arith.constant dense<0.000000e+00> : vector<16x128xf32>
    %76 = tpu.matmul %73, %75, %cst_24 {dimension_numbers = #tpu.dot_dimension_numbers<[1], [0], [0], [1], [0, 0, 1, 1], [], []>} : vector<16x128xf32>, vector<128x128xf32>, vector<16x128xf32> -> vector<16x128xf32>
    %c1_25 = arith.constant 1 : index
    %c0_26 = arith.constant 0 : index
    %c0_27 = arith.constant 0 : index
    %77 = vector.load %arg5[%c1_25, %c0_26, %c0_27] : memref<2x1x128xf32, #tpu.memory_space<vmem>>, vector<1x1x128xf32>
    %78 = vector.shape_cast %77 : vector<1x1x128xf32> to vector<1x128xf32>
    %79 = vector.broadcast %78 : vector<1x128xf32> to vector<16x128xf32>
    %80 = arith.addf %76, %79 : vector<16x128xf32>
    %81 = arith.mulf %73, %3 : vector<16x128xf32>
    %c1_28 = arith.constant 1 : index
    %c0_29 = arith.constant 0 : index
    %c0_30 = arith.constant 0 : index
    %82 = vector.load %arg6[%c1_28, %c0_29, %c0_30] : memref<2x128x128xf32, #tpu.memory_space<vmem>>, vector<1x128x128xf32>
    %83 = vector.shape_cast %82 : vector<1x128x128xf32> to vector<128x128xf32>
    %cst_31 = arith.constant dense<0.000000e+00> : vector<16x128xf32>
    %84 = tpu.matmul %81, %83, %cst_31 {dimension_numbers = #tpu.dot_dimension_numbers<[1], [0], [0], [1], [0, 0, 1, 1], [], []>} : vector<16x128xf32>, vector<128x128xf32>, vector<16x128xf32> -> vector<16x128xf32>
    %c1_32 = arith.constant 1 : index
    %c0_33 = arith.constant 0 : index
    %c0_34 = arith.constant 0 : index
    %85 = vector.load %arg7[%c1_32, %c0_33, %c0_34] : memref<2x1x128xf32, #tpu.memory_space<vmem>>, vector<1x1x128xf32>
    %86 = vector.shape_cast %85 : vector<1x1x128xf32> to vector<1x128xf32>
    %87 = vector.broadcast %86 : vector<1x128xf32> to vector<16x128xf32>
    %88 = arith.addf %84, %87 : vector<16x128xf32>
    %89 = vector.shape_cast %88 : vector<16x128xf32> to vector<2x8x128xf32>
    %cst_35 = arith.constant 0.000000e+00 : f32
    %90 = vector.broadcast %cst_35 : f32 to vector<2x8x128xf32>
    %91 = vector.extract_strided_slice %4 {offsets = [0, 0, 0], sizes = [2, 8, 1], strides = [1, 1, 1]} : vector<2x8x8xf32> to vector<2x8x1xf32>
    %92 = vector.extract_strided_slice %89 {offsets = [0, 0, 0], sizes = [2, 1, 128], strides = [1, 1, 1]} : vector<2x8x128xf32> to vector<2x1x128xf32>
    %93 = vector.broadcast %91 : vector<2x8x1xf32> to vector<2x8x128xf32>
    %94 = vector.broadcast %92 : vector<2x1x128xf32> to vector<2x8x128xf32>
    %95 = arith.mulf %93, %94 : vector<2x8x128xf32>
    %96 = arith.addf %90, %95 : vector<2x8x128xf32>
    %97 = vector.extract_strided_slice %4 {offsets = [0, 0, 1], sizes = [2, 8, 1], strides = [1, 1, 1]} : vector<2x8x8xf32> to vector<2x8x1xf32>
    %98 = vector.extract_strided_slice %89 {offsets = [0, 1, 0], sizes = [2, 1, 128], strides = [1, 1, 1]} : vector<2x8x128xf32> to vector<2x1x128xf32>
    %99 = vector.broadcast %97 : vector<2x8x1xf32> to vector<2x8x128xf32>
    %100 = vector.broadcast %98 : vector<2x1x128xf32> to vector<2x8x128xf32>
    %101 = arith.mulf %99, %100 : vector<2x8x128xf32>
    %102 = arith.addf %96, %101 : vector<2x8x128xf32>
    %103 = vector.extract_strided_slice %4 {offsets = [0, 0, 2], sizes = [2, 8, 1], strides = [1, 1, 1]} : vector<2x8x8xf32> to vector<2x8x1xf32>
    %104 = vector.extract_strided_slice %89 {offsets = [0, 2, 0], sizes = [2, 1, 128], strides = [1, 1, 1]} : vector<2x8x128xf32> to vector<2x1x128xf32>
    %105 = vector.broadcast %103 : vector<2x8x1xf32> to vector<2x8x128xf32>
    %106 = vector.broadcast %104 : vector<2x1x128xf32> to vector<2x8x128xf32>
    %107 = arith.mulf %105, %106 : vector<2x8x128xf32>
    %108 = arith.addf %102, %107 : vector<2x8x128xf32>
    %109 = vector.extract_strided_slice %4 {offsets = [0, 0, 3], sizes = [2, 8, 1], strides = [1, 1, 1]} : vector<2x8x8xf32> to vector<2x8x1xf32>
    %110 = vector.extract_strided_slice %89 {offsets = [0, 3, 0], sizes = [2, 1, 128], strides = [1, 1, 1]} : vector<2x8x128xf32> to vector<2x1x128xf32>
    %111 = vector.broadcast %109 : vector<2x8x1xf32> to vector<2x8x128xf32>
    %112 = vector.broadcast %110 : vector<2x1x128xf32> to vector<2x8x128xf32>
    %113 = arith.mulf %111, %112 : vector<2x8x128xf32>
    %114 = arith.addf %108, %113 : vector<2x8x128xf32>
    %115 = vector.extract_strided_slice %4 {offsets = [0, 0, 4], sizes = [2, 8, 1], strides = [1, 1, 1]} : vector<2x8x8xf32> to vector<2x8x1xf32>
    %116 = vector.extract_strided_slice %89 {offsets = [0, 4, 0], sizes = [2, 1, 128], strides = [1, 1, 1]} : vector<2x8x128xf32> to vector<2x1x128xf32>
    %117 = vector.broadcast %115 : vector<2x8x1xf32> to vector<2x8x128xf32>
    %118 = vector.broadcast %116 : vector<2x1x128xf32> to vector<2x8x128xf32>
    %119 = arith.mulf %117, %118 : vector<2x8x128xf32>
    %120 = arith.addf %114, %119 : vector<2x8x128xf32>
    %121 = vector.extract_strided_slice %4 {offsets = [0, 0, 5], sizes = [2, 8, 1], strides = [1, 1, 1]} : vector<2x8x8xf32> to vector<2x8x1xf32>
    %122 = vector.extract_strided_slice %89 {offsets = [0, 5, 0], sizes = [2, 1, 128], strides = [1, 1, 1]} : vector<2x8x128xf32> to vector<2x1x128xf32>
    %123 = vector.broadcast %121 : vector<2x8x1xf32> to vector<2x8x128xf32>
    %124 = vector.broadcast %122 : vector<2x1x128xf32> to vector<2x8x128xf32>
    %125 = arith.mulf %123, %124 : vector<2x8x128xf32>
    %126 = arith.addf %120, %125 : vector<2x8x128xf32>
    %127 = vector.extract_strided_slice %4 {offsets = [0, 0, 6], sizes = [2, 8, 1], strides = [1, 1, 1]} : vector<2x8x8xf32> to vector<2x8x1xf32>
    %128 = vector.extract_strided_slice %89 {offsets = [0, 6, 0], sizes = [2, 1, 128], strides = [1, 1, 1]} : vector<2x8x128xf32> to vector<2x1x128xf32>
    %129 = vector.broadcast %127 : vector<2x8x1xf32> to vector<2x8x128xf32>
    %130 = vector.broadcast %128 : vector<2x1x128xf32> to vector<2x8x128xf32>
    %131 = arith.mulf %129, %130 : vector<2x8x128xf32>
    %132 = arith.addf %126, %131 : vector<2x8x128xf32>
    %133 = vector.extract_strided_slice %4 {offsets = [0, 0, 7], sizes = [2, 8, 1], strides = [1, 1, 1]} : vector<2x8x8xf32> to vector<2x8x1xf32>
    %134 = vector.extract_strided_slice %89 {offsets = [0, 7, 0], sizes = [2, 1, 128], strides = [1, 1, 1]} : vector<2x8x128xf32> to vector<2x1x128xf32>
    %135 = vector.broadcast %133 : vector<2x8x1xf32> to vector<2x8x128xf32>
    %136 = vector.broadcast %134 : vector<2x1x128xf32> to vector<2x8x128xf32>
    %137 = arith.mulf %135, %136 : vector<2x8x128xf32>
    %138 = arith.addf %132, %137 : vector<2x8x128xf32>
    %139 = vector.shape_cast %138 : vector<2x8x128xf32> to vector<16x128xf32>
    %140 = arith.addf %80, %139 : vector<16x128xf32>
    %141 = arith.addf %140, %73 : vector<16x128xf32>
    %142 = math.tanh %141 : vector<16x128xf32>
    %143 = vector.shape_cast %142 : vector<16x128xf32> to vector<2x8x128xf32>
    %c0_36 = arith.constant 0 : index
    %c0_37 = arith.constant 0 : index
    %c0_38 = arith.constant 0 : index
    %144 = vector.load %arg8[%c0_36, %c0_37, %c0_38] : memref<2x8x128xf32, #tpu.memory_space<vmem>>, vector<2x8x128xf32>
    tpu.vector_store %arg8[%c0_36, %c0_37, %c0_38], %143 {strides = array<i32>} : memref<2x8x128xf32, #tpu.memory_space<vmem>>, vector<2x8x128xf32>,
    return
  }
  func.func @transform_0(%arg0: i32) -> (i32, i32, i32) {
    %c0_i32 = arith.constant 0 : i32
    %c0_i32_0 = arith.constant 0 : i32
    %c0_i32_1 = arith.constant 0 : i32
    return %arg0, %c0_i32, %c0_i32_0 : i32, i32, i32
  }
  func.func @transform_1(%arg0: i32) -> (i32, i32, i32) {
    %c0_i32 = arith.constant 0 : i32
    %c0_i32_0 = arith.constant 0 : i32
    %c0_i32_1 = arith.constant 0 : i32
    return %arg0, %c0_i32, %c0_i32_0 : i32, i32, i32
  }
  func.func @transform_2(%arg0: i32) -> (i32, i32, i32) {
    %c0_i32 = arith.constant 0 : i32
    %c0_i32_0 = arith.constant 0 : i32
    %c0_i32_1 = arith.constant 0 : i32
    return %arg0, %c0_i32, %c0_i32_0 : i32, i32, i32
  }
  func.func @transform_3(%arg0: i32) -> (i32, i32, i32) {
    %c0_i32 = arith.constant 0 : i32
    %c0_i32_0 = arith.constant 0 : i32
    %c0_i32_1 = arith.constant 0 : i32
    %c0_i32_2 = arith.constant 0 : i32
    return %c0_i32, %c0_i32_0, %c0_i32_1 : i32, i32, i32
  }
  func.func @transform_4(%arg0: i32) -> (i32, i32, i32) {
    %c0_i32 = arith.constant 0 : i32
    %c0_i32_0 = arith.constant 0 : i32
    %c0_i32_1 = arith.constant 0 : i32
    %c0_i32_2 = arith.constant 0 : i32
    return %c0_i32, %c0_i32_0, %c0_i32_1 : i32, i32, i32
  }
  func.func @transform_5(%arg0: i32) -> (i32, i32, i32) {
    %c0_i32 = arith.constant 0 : i32
    %c0_i32_0 = arith.constant 0 : i32
    %c0_i32_1 = arith.constant 0 : i32
    %c0_i32_2 = arith.constant 0 : i32
    return %c0_i32, %c0_i32_0, %c0_i32_1 : i32, i32, i32
  }
  func.func @transform_6(%arg0: i32) -> (i32, i32, i32) {
    %c0_i32 = arith.constant 0 : i32
    %c0_i32_0 = arith.constant 0 : i32
    %c0_i32_1 = arith.constant 0 : i32
    %c0_i32_2 = arith.constant 0 : i32
    return %c0_i32, %c0_i32_0, %c0_i32_1 : i32, i32, i32
  }
  func.func @transform_7(%arg0: i32) -> (i32, i32, i32) {
    %c0_i32 = arith.constant 0 : i32
    %c0_i32_0 = arith.constant 0 : i32
    %c0_i32_1 = arith.constant 0 : i32
    return %arg0, %c0_i32, %c0_i32_0 : i32, i32, i32
  }
}

module attributes {stable_mosaic.version = 11 : i64} {
  func.func @kernel(%arg0: i32, %arg1: memref<2x8x128xf32, #tpu.memory_space<vmem>>, %arg2: memref<2x8x128xf32, #tpu.memory_space<vmem>>, %arg3: memref<2x8x8xf32, #tpu.memory_space<vmem>>, %arg4: memref<2x128x128xf32, #tpu.memory_space<vmem>>, %arg5: memref<2x1x128xf32, #tpu.memory_space<vmem>>, %arg6: memref<2x128x128xf32, #tpu.memory_space<vmem>>, %arg7: memref<2x1x128xf32, #tpu.memory_space<vmem>>, %arg8: memref<2x8x128xf32, #tpu.memory_space<vmem>>) attributes {dimension_semantics = [#tpu.dimension_semantics<parallel>], iteration_bounds = array<i64: 1>, scalar_prefetch = 0 : i64, scratch_operands = 0 : i64, tpu.core_type = #tpu.core_type<tc>, window_params = [{transform_indices = @transform_0, window_bounds = array<i64: 2, 8, 128>}, {transform_indices = @transform_1, window_bounds = array<i64: 2, 8, 128>}, {transform_indices = @transform_2, window_bounds = array<i64: 2, 8, 8>}, {pipeline_mode = #tpu.pipeline_mode<synchronous>, transform_indices = @transform_3, window_bounds = array<i64: 2, 128, 128>}, {pipeline_mode = #tpu.pipeline_mode<synchronous>, transform_indices = @transform_4, window_bounds = array<i64: 2, 1, 128>}, {pipeline_mode = #tpu.pipeline_mode<synchronous>, transform_indices = @transform_5, window_bounds = array<i64: 2, 128, 128>}, {pipeline_mode = #tpu.pipeline_mode<synchronous>, transform_indices = @transform_6, window_bounds = array<i64: 2, 1, 128>}, {transform_indices = @transform_7, window_bounds = array<i64: 2, 8, 128>}]} {
    %c0 = arith.constant 0 : index
    %c0_0 = arith.constant 0 : index
    %c0_1 = arith.constant 0 : index
    %0 = vector.load %arg1[%c0, %c0_0, %c0_1] : memref<2x8x128xf32, #tpu.memory_space<vmem>>, vector<2x8x128xf32>
    %1 = vector.shape_cast %0 : vector<2x8x128xf32> to vector<16x128xf32>
    %c0_2 = arith.constant 0 : index
    %c0_3 = arith.constant 0 : index
    %c0_4 = arith.constant 0 : index
    %2 = vector.load %arg2[%c0_2, %c0_3, %c0_4] : memref<2x8x128xf32, #tpu.memory_space<vmem>>, vector<2x8x128xf32>
    %3 = vector.shape_cast %2 : vector<2x8x128xf32> to vector<16x128xf32>
    %c0_5 = arith.constant 0 : index
    %c0_6 = arith.constant 0 : index
    %c0_7 = arith.constant 0 : index
    %4 = vector.load %arg3[%c0_5, %c0_6, %c0_7] : memref<2x8x8xf32, #tpu.memory_space<vmem>>, vector<2x8x8xf32>
    %c0_8 = arith.constant 0 : index
    %c0_9 = arith.constant 0 : index
    %c0_10 = arith.constant 0 : index
    %5 = vector.load %arg4[%c0_8, %c0_9, %c0_10] : memref<2x128x128xf32, #tpu.memory_space<vmem>>, vector<1x128x128xf32>
    %6 = vector.shape_cast %5 : vector<1x128x128xf32> to vector<128x128xf32>
    %cst = arith.constant dense<0.000000e+00> : vector<16x128xf32>
    %7 = tpu.matmul %1, %6, %cst {dimension_numbers = #tpu.dot_dimension_numbers<[1], [0], [0], [1], [0, 0, 1, 1], [], []>} : vector<16x128xf32>, vector<128x128xf32>, vector<16x128xf32> -> vector<16x128xf32>
    %c0_11 = arith.constant 0 : index
    %c0_12 = arith.constant 0 : index
    %c0_13 = arith.constant 0 : index
    %8 = vector.load %arg5[%c0_11, %c0_12, %c0_13] : memref<2x1x128xf32, #tpu.memory_space<vmem>>, vector<1x1x128xf32>
    %9 = vector.shape_cast %8 : vector<1x1x128xf32> to vector<1x128xf32>
    %10 = vector.broadcast %9 : vector<1x128xf32> to vector<16x128xf32>
    %11 = arith.addf %7, %10 : vector<16x128xf32>
    %12 = arith.mulf %1, %3 : vector<16x128xf32>
    %c0_14 = arith.constant 0 : index
    %c0_15 = arith.constant 0 : index
    %c0_16 = arith.constant 0 : index
    %13 = vector.load %arg6[%c0_14, %c0_15, %c0_16] : memref<2x128x128xf32, #tpu.memory_space<vmem>>, vector<1x128x128xf32>
    %14 = vector.shape_cast %13 : vector<1x128x128xf32> to vector<128x128xf32>
    %cst_17 = arith.constant dense<0.000000e+00> : vector<16x128xf32>
    %15 = tpu.matmul %12, %14, %cst_17 {dimension_numbers = #tpu.dot_dimension_numbers<[1], [0], [0], [1], [0, 0, 1, 1], [], []>} : vector<16x128xf32>, vector<128x128xf32>, vector<16x128xf32> -> vector<16x128xf32>
    %c0_18 = arith.constant 0 : index
    %c0_19 = arith.constant 0 : index
    %c0_20 = arith.constant 0 : index
    %16 = vector.load %arg7[%c0_18, %c0_19, %c0_20] : memref<2x1x128xf32, #tpu.memory_space<vmem>>, vector<1x1x128xf32>
    %17 = vector.shape_cast %16 : vector<1x1x128xf32> to vector<1x128xf32>
    %18 = vector.broadcast %17 : vector<1x128xf32> to vector<16x128xf32>
    %19 = arith.addf %15, %18 : vector<16x128xf32>
    %20 = vector.shape_cast %19 : vector<16x128xf32> to vector<2x8x128xf32>
    %cst_21 = arith.constant 0.000000e+00 : f32
    %21 = vector.broadcast %cst_21 : f32 to vector<2x8x128xf32>
    %22 = vector.extract_strided_slice %4 {offsets = [0, 0, 0], sizes = [2, 8, 1], strides = [1, 1, 1]} : vector<2x8x8xf32> to vector<2x8x1xf32>
    %23 = vector.extract_strided_slice %20 {offsets = [0, 0, 0], sizes = [2, 1, 128], strides = [1, 1, 1]} : vector<2x8x128xf32> to vector<2x1x128xf32>
    %24 = vector.broadcast %22 : vector<2x8x1xf32> to vector<2x8x128xf32>
    %25 = vector.broadcast %23 : vector<2x1x128xf32> to vector<2x8x128xf32>
    %26 = arith.mulf %24, %25 : vector<2x8x128xf32>
    %27 = arith.addf %21, %26 : vector<2x8x128xf32>
    %28 = vector.extract_strided_slice %4 {offsets = [0, 0, 1], sizes = [2, 8, 1], strides = [1, 1, 1]} : vector<2x8x8xf32> to vector<2x8x1xf32>
    %29 = vector.extract_strided_slice %20 {offsets = [0, 1, 0], sizes = [2, 1, 128], strides = [1, 1, 1]} : vector<2x8x128xf32> to vector<2x1x128xf32>
    %30 = vector.broadcast %28 : vector<2x8x1xf32> to vector<2x8x128xf32>
    %31 = vector.broadcast %29 : vector<2x1x128xf32> to vector<2x8x128xf32>
    %32 = arith.mulf %30, %31 : vector<2x8x128xf32>
    %33 = arith.addf %27, %32 : vector<2x8x128xf32>
    %34 = vector.extract_strided_slice %4 {offsets = [0, 0, 2], sizes = [2, 8, 1], strides = [1, 1, 1]} : vector<2x8x8xf32> to vector<2x8x1xf32>
    %35 = vector.extract_strided_slice %20 {offsets = [0, 2, 0], sizes = [2, 1, 128], strides = [1, 1, 1]} : vector<2x8x128xf32> to vector<2x1x128xf32>
    %36 = vector.broadcast %34 : vector<2x8x1xf32> to vector<2x8x128xf32>
    %37 = vector.broadcast %35 : vector<2x1x128xf32> to vector<2x8x128xf32>
    %38 = arith.mulf %36, %37 : vector<2x8x128xf32>
    %39 = arith.addf %33, %38 : vector<2x8x128xf32>
    %40 = vector.extract_strided_slice %4 {offsets = [0, 0, 3], sizes = [2, 8, 1], strides = [1, 1, 1]} : vector<2x8x8xf32> to vector<2x8x1xf32>
    %41 = vector.extract_strided_slice %20 {offsets = [0, 3, 0], sizes = [2, 1, 128], strides = [1, 1, 1]} : vector<2x8x128xf32> to vector<2x1x128xf32>
    %42 = vector.broadcast %40 : vector<2x8x1xf32> to vector<2x8x128xf32>
    %43 = vector.broadcast %41 : vector<2x1x128xf32> to vector<2x8x128xf32>
    %44 = arith.mulf %42, %43 : vector<2x8x128xf32>
    %45 = arith.addf %39, %44 : vector<2x8x128xf32>
    %46 = vector.extract_strided_slice %4 {offsets = [0, 0, 4], sizes = [2, 8, 1], strides = [1, 1, 1]} : vector<2x8x8xf32> to vector<2x8x1xf32>
    %47 = vector.extract_strided_slice %20 {offsets = [0, 4, 0], sizes = [2, 1, 128], strides = [1, 1, 1]} : vector<2x8x128xf32> to vector<2x1x128xf32>
    %48 = vector.broadcast %46 : vector<2x8x1xf32> to vector<2x8x128xf32>
    %49 = vector.broadcast %47 : vector<2x1x128xf32> to vector<2x8x128xf32>
    %50 = arith.mulf %48, %49 : vector<2x8x128xf32>
    %51 = arith.addf %45, %50 : vector<2x8x128xf32>
    %52 = vector.extract_strided_slice %4 {offsets = [0, 0, 5], sizes = [2, 8, 1], strides = [1, 1, 1]} : vector<2x8x8xf32> to vector<2x8x1xf32>
    %53 = vector.extract_strided_slice %20 {offsets = [0, 5, 0], sizes = [2, 1, 128], strides = [1, 1, 1]} : vector<2x8x128xf32> to vector<2x1x128xf32>
    %54 = vector.broadcast %52 : vector<2x8x1xf32> to vector<2x8x128xf32>
    %55 = vector.broadcast %53 : vector<2x1x128xf32> to vector<2x8x128xf32>
    %56 = arith.mulf %54, %55 : vector<2x8x128xf32>
    %57 = arith.addf %51, %56 : vector<2x8x128xf32>
    %58 = vector.extract_strided_slice %4 {offsets = [0, 0, 6], sizes = [2, 8, 1], strides = [1, 1, 1]} : vector<2x8x8xf32> to vector<2x8x1xf32>
    %59 = vector.extract_strided_slice %20 {offsets = [0, 6, 0], sizes = [2, 1, 128], strides = [1, 1, 1]} : vector<2x8x128xf32> to vector<2x1x128xf32>
    %60 = vector.broadcast %58 : vector<2x8x1xf32> to vector<2x8x128xf32>
    %61 = vector.broadcast %59 : vector<2x1x128xf32> to vector<2x8x128xf32>
    %62 = arith.mulf %60, %61 : vector<2x8x128xf32>
    %63 = arith.addf %57, %62 : vector<2x8x128xf32>
    %64 = vector.extract_strided_slice %4 {offsets = [0, 0, 7], sizes = [2, 8, 1], strides = [1, 1, 1]} : vector<2x8x8xf32> to vector<2x8x1xf32>
    %65 = vector.extract_strided_slice %20 {offsets = [0, 7, 0], sizes = [2, 1, 128], strides = [1, 1, 1]} : vector<2x8x128xf32> to vector<2x1x128xf32>
    %66 = vector.broadcast %64 : vector<2x8x1xf32> to vector<2x8x128xf32>
    %67 = vector.broadcast %65 : vector<2x1x128xf32> to vector<2x8x128xf32>
    %68 = arith.mulf %66, %67 : vector<2x8x128xf32>
    %69 = arith.addf %63, %68 : vector<2x8x128xf32>
    %70 = vector.shape_cast %69 : vector<2x8x128xf32> to vector<16x128xf32>
    %71 = arith.addf %11, %70 : vector<16x128xf32>
    %72 = arith.addf %71, %1 : vector<16x128xf32>
    %73 = math.tanh %72 : vector<16x128xf32>
    %c1 = arith.constant 1 : index
    %c0_22 = arith.constant 0 : index
    %c0_23 = arith.constant 0 : index
    %74 = vector.load %arg4[%c1, %c0_22, %c0_23] : memref<2x128x128xf32, #tpu.memory_space<vmem>>, vector<1x128x128xf32>
    %75 = vector.shape_cast %74 : vector<1x128x128xf32> to vector<128x128xf32>
    %cst_24 = arith.constant dense<0.000000e+00> : vector<16x128xf32>
    %76 = tpu.matmul %73, %75, %cst_24 {dimension_numbers = #tpu.dot_dimension_numbers<[1], [0], [0], [1], [0, 0, 1, 1], [], []>} : vector<16x128xf32>, vector<128x128xf32>, vector<16x128xf32> -> vector<16x128xf32>
    %c1_25 = arith.constant 1 : index
    %c0_26 = arith.constant 0 : index
    %c0_27 = arith.constant 0 : index
    %77 = vector.load %arg5[%c1_25, %c0_26, %c0_27] : memref<2x1x128xf32, #tpu.memory_space<vmem>>, vector<1x1x128xf32>
    %78 = vector.shape_cast %77 : vector<1x1x128xf32> to vector<1x128xf32>
    %79 = vector.broadcast %78 : vector<1x128xf32> to vector<16x128xf32>
    %80 = arith.addf %76, %79 : vector<16x128xf32>
    %81 = arith.mulf %73, %3 : vector<16x128xf32>
    %c1_28 = arith.constant 1 : index
    %c0_29 = arith.constant 0 : index
    %c0_30 = arith.constant 0 : index
    %82 = vector.load %arg6[%c1_28, %c0_29, %c0_30] : memref<2x128x128xf32, #tpu.memory_space<vmem>>, vector<1x128x128xf32>
    %83 = vector.shape_cast %82 : vector<1x128x128xf32> to vector<128x128xf32>
    %cst_31 = arith.constant dense<0.000000e+00> : vector<16x128xf32>
    %84 = tpu.matmul %81, %83, %cst_31 {dimension_numbers = #tpu.dot_dimension_numbers<[1], [0], [0], [1], [0, 0, 1, 1], [], []>} : vector<16x128xf32>, vector<128x128xf32>, vector<16x128xf32> -> vector<16x128xf32>
    %c1_32 = arith.constant 1 : index
    %c0_33 = arith.constant 0 : index
    %c0_34 = arith.constant 0 : index
    %85 = vector.load %arg7[%c1_32, %c0_33, %c0_34] : memref<2x1x128xf32, #tpu.memory_space<vmem>>, vector<1x1x128xf32>
    %86 = vector.shape_cast %85 : vector<1x1x128xf32> to vector<1x128xf32>
    %87 = vector.broadcast %86 : vector<1x128xf32> to vector<16x128xf32>
    %88 = arith.addf %84, %87 : vector<16x128xf32>
    %89 = vector.shape_cast %88 : vector<16x128xf32> to vector<2x8x128xf32>
    %cst_35 = arith.constant 0.000000e+00 : f32
    %90 = vector.broadcast %cst_35 : f32 to vector<2x8x128xf32>
    %91 = vector.extract_strided_slice %4 {offsets = [0, 0, 0], sizes = [2, 8, 1], strides = [1, 1, 1]} : vector<2x8x8xf32> to vector<2x8x1xf32>
    %92 = vector.extract_strided_slice %89 {offsets = [0, 0, 0], sizes = [2, 1, 128], strides = [1, 1, 1]} : vector<2x8x128xf32> to vector<2x1x128xf32>
    %93 = vector.broadcast %91 : vector<2x8x1xf32> to vector<2x8x128xf32>
    %94 = vector.broadcast %92 : vector<2x1x128xf32> to vector<2x8x128xf32>
    %95 = arith.mulf %93, %94 : vector<2x8x128xf32>
    %96 = arith.addf %90, %95 : vector<2x8x128xf32>
    %97 = vector.extract_strided_slice %4 {offsets = [0, 0, 1], sizes = [2, 8, 1], strides = [1, 1, 1]} : vector<2x8x8xf32> to vector<2x8x1xf32>
    %98 = vector.extract_strided_slice %89 {offsets = [0, 1, 0], sizes = [2, 1, 128], strides = [1, 1, 1]} : vector<2x8x128xf32> to vector<2x1x128xf32>
    %99 = vector.broadcast %97 : vector<2x8x1xf32> to vector<2x8x128xf32>
    %100 = vector.broadcast %98 : vector<2x1x128xf32> to vector<2x8x128xf32>
    %101 = arith.mulf %99, %100 : vector<2x8x128xf32>
    %102 = arith.addf %96, %101 : vector<2x8x128xf32>
    %103 = vector.extract_strided_slice %4 {offsets = [0, 0, 2], sizes = [2, 8, 1], strides = [1, 1, 1]} : vector<2x8x8xf32> to vector<2x8x1xf32>
    %104 = vector.extract_strided_slice %89 {offsets = [0, 2, 0], sizes = [2, 1, 128], strides = [1, 1, 1]} : vector<2x8x128xf32> to vector<2x1x128xf32>
    %105 = vector.broadcast %103 : vector<2x8x1xf32> to vector<2x8x128xf32>
    %106 = vector.broadcast %104 : vector<2x1x128xf32> to vector<2x8x128xf32>
    %107 = arith.mulf %105, %106 : vector<2x8x128xf32>
    %108 = arith.addf %102, %107 : vector<2x8x128xf32>
    %109 = vector.extract_strided_slice %4 {offsets = [0, 0, 3], sizes = [2, 8, 1], strides = [1, 1, 1]} : vector<2x8x8xf32> to vector<2x8x1xf32>
    %110 = vector.extract_strided_slice %89 {offsets = [0, 3, 0], sizes = [2, 1, 128], strides = [1, 1, 1]} : vector<2x8x128xf32> to vector<2x1x128xf32>
    %111 = vector.broadcast %109 : vector<2x8x1xf32> to vector<2x8x128xf32>
    %112 = vector.broadcast %110 : vector<2x1x128xf32> to vector<2x8x128xf32>
    %113 = arith.mulf %111, %112 : vector<2x8x128xf32>
    %114 = arith.addf %108, %113 : vector<2x8x128xf32>
    %115 = vector.extract_strided_slice %4 {offsets = [0, 0, 4], sizes = [2, 8, 1], strides = [1, 1, 1]} : vector<2x8x8xf32> to vector<2x8x1xf32>
    %116 = vector.extract_strided_slice %89 {offsets = [0, 4, 0], sizes = [2, 1, 128], strides = [1, 1, 1]} : vector<2x8x128xf32> to vector<2x1x128xf32>
    %117 = vector.broadcast %115 : vector<2x8x1xf32> to vector<2x8x128xf32>
    %118 = vector.broadcast %116 : vector<2x1x128xf32> to vector<2x8x128xf32>
    %119 = arith.mulf %117, %118 : vector<2x8x128xf32>
    %120 = arith.addf %114, %119 : vector<2x8x128xf32>
    %121 = vector.extract_strided_slice %4 {offsets = [0, 0, 5], sizes = [2, 8, 1], strides = [1, 1, 1]} : vector<2x8x8xf32> to vector<2x8x1xf32>
    %122 = vector.extract_strided_slice %89 {offsets = [0, 5, 0], sizes = [2, 1, 128], strides = [1, 1, 1]} : vector<2x8x128xf32> to vector<2x1x128xf32>
    %123 = vector.broadcast %121 : vector<2x8x1xf32> to vector<2x8x128xf32>
    %124 = vector.broadcast %122 : vector<2x1x128xf32> to vector<2x8x128xf32>
    %125 = arith.mulf %123, %124 : vector<2x8x128xf32>
    %126 = arith.addf %120, %125 : vector<2x8x128xf32>
    %127 = vector.extract_strided_slice %4 {offsets = [0, 0, 6], sizes = [2, 8, 1], strides = [1, 1, 1]} : vector<2x8x8xf32> to vector<2x8x1xf32>
    %128 = vector.extract_strided_slice %89 {offsets = [0, 6, 0], sizes = [2, 1, 128], strides = [1, 1, 1]} : vector<2x8x128xf32> to vector<2x1x128xf32>
    %129 = vector.broadcast %127 : vector<2x8x1xf32> to vector<2x8x128xf32>
    %130 = vector.broadcast %128 : vector<2x1x128xf32> to vector<2x8x128xf32>
    %131 = arith.mulf %129, %130 : vector<2x8x128xf32>
    %132 = arith.addf %126, %131 : vector<2x8x128xf32>
    %133 = vector.extract_strided_slice %4 {offsets = [0, 0, 7], sizes = [2, 8, 1], strides = [1, 1, 1]} : vector<2x8x8xf32> to vector<2x8x1xf32>
    %134 = vector.extract_strided_slice %89 {offsets = [0, 7, 0], sizes = [2, 1, 128], strides = [1, 1, 1]} : vector<2x8x128xf32> to vector<2x1x128xf32>
    %135 = vector.broadcast %133 : vector<2x8x1xf32> to vector<2x8x128xf32>
    %136 = vector.broadcast %134 : vector<2x1x128xf32> to vector<2x8x128xf32>
    %137 = arith.mulf %135, %136 : vector<2x8x128xf32>
    %138 = arith.addf %132, %137 : vector<2x8x128xf32>
    %139 = vector.shape_cast %138 : vector<2x8x128xf32> to vector<16x128xf32>
    %140 = arith.addf %80, %139 : vector<16x128xf32>
    %141 = arith.addf %140, %73 : vector<16x128xf32>
    %142 = math.tanh %141 : vector<16x128xf32>
    %143 = vector.shape_cast %142 : vector<16x128xf32> to vector<2x8x128xf32>
    %c0_36 = arith.constant 0 : index
    %c0_37 = arith.constant 0 : index
    %c0_38 = arith.constant 0 : index
    %144 = vector.load %arg8[%c0_36, %c0_37, %c0_38] : memref<2x8x128xf32, #tpu.memory_space<vmem>>, vector<2x8x128xf32>
    tpu.vector_store %arg8[%c0_36, %c0_37, %c0_38], %143 {strides = array<i32>} : memref<2x8x128xf32, #tpu.memory_space<vmem>>, vector<2x8x128xf32>,
    return
  }
  func.func @transform_0(%arg0: i32) -> (i32, i32, i32) {
    %c0_i32 = arith.constant 0 : i32
    %c0_i32_0 = arith.constant 0 : i32
    %c0_i32_1 = arith.constant 0 : i32
    return %arg0, %c0_i32, %c0_i32_0 : i32, i32, i32
  }
  func.func @transform_1(%arg0: i32) -> (i32, i32, i32) {
    %c0_i32 = arith.constant 0 : i32
    %c0_i32_0 = arith.constant 0 : i32
    %c0_i32_1 = arith.constant 0 : i32
    return %arg0, %c0_i32, %c0_i32_0 : i32, i32, i32
  }
  func.func @transform_2(%arg0: i32) -> (i32, i32, i32) {
    %c0_i32 = arith.constant 0 : i32
    %c0_i32_0 = arith.constant 0 : i32
    %c0_i32_1 = arith.constant 0 : i32
    return %arg0, %c0_i32, %c0_i32_0 : i32, i32, i32
  }
  func.func @transform_3(%arg0: i32) -> (i32, i32, i32) {
    %c0_i32 = arith.constant 0 : i32
    %c0_i32_0 = arith.constant 0 : i32
    %c0_i32_1 = arith.constant 0 : i32
    %c0_i32_2 = arith.constant 0 : i32
    return %c0_i32, %c0_i32_0, %c0_i32_1 : i32, i32, i32
  }
  func.func @transform_4(%arg0: i32) -> (i32, i32, i32) {
    %c0_i32 = arith.constant 0 : i32
    %c0_i32_0 = arith.constant 0 : i32
    %c0_i32_1 = arith.constant 0 : i32
    %c0_i32_2 = arith.constant 0 : i32
    return %c0_i32, %c0_i32_0, %c0_i32_1 : i32, i32, i32
  }
  func.func @transform_5(%arg0: i32) -> (i32, i32, i32) {
    %c0_i32 = arith.constant 0 : i32
    %c0_i32_0 = arith.constant 0 : i32
    %c0_i32_1 = arith.constant 0 : i32
    %c0_i32_2 = arith.constant 0 : i32
    return %c0_i32, %c0_i32_0, %c0_i32_1 : i32, i32, i32
  }
  func.func @transform_6(%arg0: i32) -> (i32, i32, i32) {
    %c0_i32 = arith.constant 0 : i32
    %c0_i32_0 = arith.constant 0 : i32
    %c0_i32_1 = arith.constant 0 : i32
    %c0_i32_2 = arith.constant 0 : i32
    return %c0_i32, %c0_i32_0, %c0_i32_1 : i32, i32, i32
  }
  func.func @transform_7(%arg0: i32) -> (i32, i32, i32) {
    %c0_i32 = arith.constant 0 : i32
    %c0_i32_0 = arith.constant 0 : i32
    %c0_i32_1 = arith.constant 0 : i32
    return %arg0, %c0_i32, %c0_i32_0 : i32, i32, i32
  }
}

</mosaic_0001>

<llo_original>
// kernel: tpu_custom_call.1
$region0: #{tpu_custom_call.1}
  #allocation0 [shape = 'u32[]', space=smem, size = 0x4, offset = 0x4, fixed_abs, tag = 'smem constant byte address 0x4 - core index']
  #allocation1 [shape = 'u32[144,128]{1,0:T(1,128)}', space=vmem, size = 0x12000, scoped, tag = 'internal scratch']
  %s0 = inlined_call_operand.hbm [shape: f32[2,8,128], index: 0, kind: input, shape index: {}]
  %s1 = inlined_call_operand.hbm [shape: f32[2,8,128], index: 1, kind: input, shape index: {}]
  %s2 = inlined_call_operand.hbm [shape: f32[2,8,8], index: 2, kind: input, shape index: {}]
  %s3 = inlined_call_operand.hbm [shape: f32[2,128,128], index: 3, kind: input, shape index: {}]
  %s4 = inlined_call_operand.vmem [shape: f32[2,1,128], index: 4, kind: input, shape index: {}]
  %s5 = inlined_call_operand.hbm [shape: f32[2,128,128], index: 5, kind: input, shape index: {}]
  %s6 = inlined_call_operand.vmem [shape: f32[2,1,128], index: 6, kind: input, shape index: {}]
  %s7 = inlined_call_operand.hbm [shape: f32[2,8,128], index: 7, kind: output, shape index: {}]
  %s8 = sld [smem:[#allocation0]]
  $region58: #{tpu_custom_call.1} parent=0
    _
  %s10 = ssub.s32 1, %s8
  %s11 = scalar_select 0, %s10, %s8
  $region1: #{tpu_custom_call.1} parent=0
    #allocation2 [shape = 'u8[8192]{0}', space=vmem, size = 0x2000, scoped, tag = 'input window, operand 0, single buffered']
    #allocation3 [shape = 's32[1]{0}', space=sflag, size = 0x4, scoped, tag = 'scoped memory for tpu_custom_call.1']
    #allocation4 [shape = 's32[1]{0}', space=sflag, size = 0x4, scoped, tag = 'scoped memory for tpu_custom_call.1']
    #allocation5 [shape = 'u8[8192]{0}', space=vmem, size = 0x2000, scoped, tag = 'input window, operand 1, single buffered']
    #allocation6 [shape = 's32[1]{0}', space=sflag, size = 0x4, scoped, tag = 'scoped memory for tpu_custom_call.1']
    #allocation7 [shape = 'u8[8192]{0}', space=vmem, size = 0x2000, scoped, tag = 'input window, operand 2, single buffered']
    #allocation8 [shape = 'u8[131072]{0}', space=vmem, size = 0x20000, scoped, tag = 'input window, operand 3, single buffered']
    #allocation9 [shape = 's32[1]{0}', space=sflag, size = 0x4, scoped, tag = 'scoped memory for tpu_custom_call.1']
    #allocation10 [shape = 'u8[131072]{0}', space=vmem, size = 0x20000, scoped, tag = 'input window, operand 5, single buffered']
    #allocation11 [shape = 'u8[8192]{0}', space=vmem, size = 0x2000, scoped, tag = 'output window, operand 0, single buffered']
    %12 = vsyncpa [#allocation3], 0
    %13 = vsyncpa [#allocation6], 0
    %14 = vsyncpa [#allocation9], 0
    %15 = vsyncpa [#allocation4], 0
    // Predicated region
    $region2: #{tpu_custom_call.1} parent=1 // pred_check
      _
    $region3: #{tpu_custom_call.1} parent=1 // pred_check_branch
      %17 = sbr.rel (0) target = $region5
    $region4: #{tpu_custom_call.1} parent=1 // pred_region
      %s19 = ssub.s32 256, 256
      %20 = vsyncadd [#allocation3], %s19
      %s21 = sshll.u32 [#allocation2], 4
      %s22 = int_to_ptr.vmem [resolvable:$true] %s21
      %27 = dma.hbm_to_vmem [thread:$0]  %s0, 256, %s22, [#allocation3], 128, 128, 8
    $region5: #{tpu_custom_call.1} parent=1 // pred_fallthru
      _
    // Predicated region
    $region6: #{tpu_custom_call.1} parent=1 // pred_check
      _
    $region7: #{tpu_custom_call.1} parent=1 // pred_check_branch
      %29 = sbr.rel (0) target = $region9
    $region8: #{tpu_custom_call.1} parent=1 // pred_region
      %s31 = ssub.s32 256, 256
      %32 = vsyncadd [#allocation6], %s31
      %s33 = sshll.u32 [#allocation5], 4
      %s34 = int_to_ptr.vmem [resolvable:$true] %s33
      %39 = dma.hbm_to_vmem [thread:$0]  %s1, 256, %s34, [#allocation6], 128, 128, 8
    $region9: #{tpu_custom_call.1} parent=1 // pred_fallthru
      _
    // Predicated region
    $region10: #{tpu_custom_call.1} parent=1 // pred_check
      _
    $region11: #{tpu_custom_call.1} parent=1 // pred_check_branch
      %41 = sbr.rel (0) target = $region13
    $region12: #{tpu_custom_call.1} parent=1 // pred_region
      %s43 = ssub.s32 256, 256
      %44 = vsyncadd [#allocation6], %s43
      %s45 = sshll.u32 [#allocation7], 4
      %s46 = int_to_ptr.vmem [resolvable:$true] %s45
      %51 = dma.hbm_to_vmem [thread:$0]  %s2, 256, %s46, [#allocation6], 128, 128, 8
    $region13: #{tpu_custom_call.1} parent=1 // pred_fallthru
      _
    // Predicated region
    $region14: #{tpu_custom_call.1} parent=1 // pred_check
      _
    $region15: #{tpu_custom_call.1} parent=1 // pred_check_branch
      %53 = sbr.rel (0) target = $region17
    $region16: #{tpu_custom_call.1} parent=1 // pred_region
      %s55 = ssub.s32 4096, 4096
      %56 = vsyncadd [#allocation9], %s55
      %s57 = sshll.u32 [#allocation8], 4
      %s58 = int_to_ptr.vmem [resolvable:$true] %s57
      %63 = dma.hbm_to_vmem [thread:$0]  %s3, 4096, %s58, [#allocation9], 128, 128, 8
    $region17: #{tpu_custom_call.1} parent=1 // pred_fallthru
      _
    // Predicated region
    $region18: #{tpu_custom_call.1} parent=1 // pred_check
      _
    $region19: #{tpu_custom_call.1} parent=1 // pred_check_branch
      %65 = sbr.rel (0) target = $region21
    $region20: #{tpu_custom_call.1} parent=1 // pred_region
      _
    $region21: #{tpu_custom_call.1} parent=1 // pred_fallthru
      _
    // Predicated region
    $region22: #{tpu_custom_call.1} parent=1 // pred_check
      _
    $region23: #{tpu_custom_call.1} parent=1 // pred_check_branch
      %67 = sbr.rel (0) target = $region25
    $region24: #{tpu_custom_call.1} parent=1 // pred_region
      %s69 = ssub.s32 4096, 4096
      %70 = vsyncadd [#allocation9], %s69
      %s71 = sshll.u32 [#allocation10], 4
      %s72 = int_to_ptr.vmem [resolvable:$true] %s71
      %77 = dma.hbm_to_vmem [thread:$0]  %s5, 4096, %s72, [#allocation9], 128, 128, 8
    $region25: #{tpu_custom_call.1} parent=1 // pred_fallthru
      _
    // Predicated region
    $region26: #{tpu_custom_call.1} parent=1 // pred_check
      _
    $region27: #{tpu_custom_call.1} parent=1 // pred_check_branch
      %79 = sbr.rel (0) target = $region29
    $region28: #{tpu_custom_call.1} parent=1 // pred_region
      _
    $region29: #{tpu_custom_call.1} parent=1 // pred_fallthru
      _
    // Predicated region
    $region30: #{tpu_custom_call.1} parent=1 // pred_check
      _
    $region31: #{tpu_custom_call.1} parent=1 // pred_check_branch
      %81 = sbr.rel (0) target = $region33
    $region32: #{tpu_custom_call.1} parent=1 // pred_region
      %82 = dma.done [#allocation3], 256
    $region33: #{tpu_custom_call.1} parent=1 // pred_fallthru
      _
    // Predicated region
    $region34: #{tpu_custom_call.1} parent=1 // pred_check
      _
    $region35: #{tpu_custom_call.1} parent=1 // pred_check_branch
      %84 = sbr.rel (0) target = $region37
    $region36: #{tpu_custom_call.1} parent=1 // pred_region
      %85 = dma.done [#allocation6], 256
    $region37: #{tpu_custom_call.1} parent=1 // pred_fallthru
      _
    // Predicated region
    $region38: #{tpu_custom_call.1} parent=1 // pred_check
      _
    $region39: #{tpu_custom_call.1} parent=1 // pred_check_branch
      %87 = sbr.rel (0) target = $region41
    $region40: #{tpu_custom_call.1} parent=1 // pred_region
      %88 = dma.done [#allocation6], 256
    $region41: #{tpu_custom_call.1} parent=1 // pred_fallthru
      _
    // Predicated region
    $region42: #{tpu_custom_call.1} parent=1 // pred_check
      _
    $region43: #{tpu_custom_call.1} parent=1 // pred_check_branch
      %90 = sbr.rel (0) target = $region45
    $region44: #{tpu_custom_call.1} parent=1 // pred_region
      %91 = dma.done [#allocation9], 4096
    $region45: #{tpu_custom_call.1} parent=1 // pred_fallthru
      _
    // Predicated region
    $region46: #{tpu_custom_call.1} parent=1 // pred_check
      _
    $region47: #{tpu_custom_call.1} parent=1 // pred_check_branch
      %93 = sbr.rel (0) target = $region49
    $region48: #{tpu_custom_call.1} parent=1 // pred_region
      %94 = dma.done [#allocation9], 4096
    $region49: #{tpu_custom_call.1} parent=1 // pred_fallthru
      _
    %v95 = vld [vmem:[#allocation2] sm:$0xff]
    %v96 = vld [vmem:[#allocation2 + $0x8] sm:$0xff]
    %v97 = vld [vmem:[#allocation5] sm:$0xff]
    %v98 = vld [vmem:[#allocation5 + $0x8] sm:$0xff]
    %v99 = vld [vmem:[#allocation7] sm:$0xff]
    %v100 = vld [vmem:[#allocation7 + $0x8] sm:$0xff]
    %v101 = vld [vmem:[#allocation8] sm:$0xff]
    %v102 = vld [vmem:[#allocation8 + $0x8] sm:$0xff]
    %v103 = vld [vmem:[#allocation8 + $0x10] sm:$0xff]
    %v104 = vld [vmem:[#allocation8 + $0x18] sm:$0xff]
    %v105 = vld [vmem:[#allocation8 + $0x20] sm:$0xff]
    %v106 = vld [vmem:[#allocation8 + $0x28] sm:$0xff]
    %v107 = vld [vmem:[#allocation8 + $0x30] sm:$0xff]
    %v108 = vld [vmem:[#allocation8 + $0x38] sm:$0xff]
    %v109 = vld [vmem:[#allocation8 + $0x40] sm:$0xff]
    %v110 = vld [vmem:[#allocation8 + $0x48] sm:$0xff]
    %v111 = vld [vmem:[#allocation8 + $0x50] sm:$0xff]
    %v112 = vld [vmem:[#allocation8 + $0x58] sm:$0xff]
    %v113 = vld [vmem:[#allocation8 + $0x60] sm:$0xff]
    %v114 = vld [vmem:[#allocation8 + $0x68] sm:$0xff]
    %v115 = vld [vmem:[#allocation8 + $0x70] sm:$0xff]
    %v116 = vld [vmem:[#allocation8 + $0x78] sm:$0xff]
    %v117 = vld [vmem:[%s4] sm:$0x1]
    %v119 = vlaneseq
    %v120 = vshrl.u32 %v119, 7
    %v121 = vsub.s32 0, %v120
    %v122 = vrot.slane %v117, %v121
    %124 = vmatprep.subr.mxu0 0.0
    %125 = vmatpush1.msra.mxu0 %v101
    %126 = vmatprep.subr.mxu0 0.0
    %127 = vmatpush1.msra.mxu0 %v102
    %128 = vmatprep.subr.mxu0 0.0
    %129 = vmatpush1.msra.mxu0 %v103
    %130 = vmatprep.subr.mxu0 0.0
    %131 = vmatpush1.msra.mxu0 %v104
    %132 = vmatprep.subr.mxu0 0.0
    %133 = vmatpush1.msra.mxu0 %v105
    %134 = vmatprep.subr.mxu0 0.0
    %135 = vmatpush1.msra.mxu0 %v106
    %136 = vmatprep.subr.mxu0 0.0
    %137 = vmatpush1.msra.mxu0 %v107
    %138 = vmatprep.subr.mxu0 0.0
    %139 = vmatpush1.msra.mxu0 %v108
    %140 = vmatprep.subr.mxu0 0.0
    %141 = vmatpush1.msra.mxu0 %v109
    %142 = vmatprep.subr.mxu0 0.0
    %143 = vmatpush1.msra.mxu0 %v110
    %144 = vmatprep.subr.mxu0 0.0
    %145 = vmatpush1.msra.mxu0 %v111
    %146 = vmatprep.subr.mxu0 0.0
    %147 = vmatpush1.msra.mxu0 %v112
    %148 = vmatprep.subr.mxu0 0.0
    %149 = vmatpush1.msra.mxu0 %v113
    %150 = vmatprep.subr.mxu0 0.0
    %151 = vmatpush1.msra.mxu0 %v114
    %152 = vmatprep.subr.mxu0 0.0
    %153 = vmatpush1.msra.mxu0 %v115
    %154 = vmatprep.subr.mxu0 0.0
    %155 = vmatpush1.msra.mxu0 %v116
    %156 = vmatprep.subr.mxu0 0.0
    %157 = vmatpush1.msra.mxu0 0.0
    %158 = vmatprep.subr.mxu0 0.0
    %159 = vmatpush1.msra.mxu0 0.0
    %160 = vmatprep.subr.mxu0 0.0
    %161 = vmatpush1.msra.mxu0 0.0
    %162 = vmatprep.subr.mxu0 0.0
    %163 = vmatpush1.msra.mxu0 0.0
    %164 = vmatprep.subr.mxu0 0.0
    %165 = vmatpush1.msra.mxu0 0.0
    %166 = vmatprep.subr.mxu0 0.0
    %167 = vmatpush1.msra.mxu0 0.0
    %168 = vmatprep.subr.mxu0 0.0
    %169 = vmatpush1.msra.mxu0 0.0
    %170 = vmatprep.subr.mxu0 0.0
    %171 = vmatpush1.msra.mxu0 0.0
    %172 = vmatprep.subr.mxu0 0.0
    %173 = vmatpush1.msra.mxu0 0.0
    %174 = vmatprep.subr.mxu0 0.0
    %175 = vmatpush1.msra.mxu0 0.0
    %176 = vmatprep.subr.mxu0 0.0
    %177 = vmatpush1.msra.mxu0 0.0
    %178 = vmatprep.subr.mxu0 0.0
    %179 = vmatpush1.msra.mxu0 0.0
    %180 = vmatprep.subr.mxu0 0.0
    %181 = vmatpush1.msra.mxu0 0.0
    %182 = vmatprep.subr.mxu0 0.0
    %183 = vmatpush1.msra.mxu0 0.0
    %184 = vmatprep.subr.mxu0 0.0
    %185 = vmatpush1.msra.mxu0 0.0
    %186 = vmatprep.subr.mxu0 0.0
    %187 = vmatpush1.msra.mxu0 0.0
    %188 = vmatprep.mubr.f32.mxu0 0.0
    %189 = vmatmul.mubr.f32.gmra.mrb[0].mxu0 %v95
    %v190 = vpop.f32.mrb[0].mxu0
    %v191 = vadd.f32 %v122, %v190
    %v192 = vpop.f32.mrb[0].mxu0
    %193 = vmatprep.mubr.f32.mxu0 0.0
    %194 = vmatmul.mubr.f32.gmra.mrb[0].mxu0 %v96
    %v195 = vpop.f32.mrb[0].mxu0
    %v196 = vadd.f32 %v122, %v195
    %v197 = vpop.f32.mrb[0].mxu0
    %198 = vdwg.mxu0
    %v199 = vmul.f32 %v95, %v97
    %v200 = vmul.f32 %v96, %v98
    %v201 = vld [vmem:[#allocation10] sm:$0xff]
    %v202 = vld [vmem:[#allocation10 + $0x8] sm:$0xff]
    %v203 = vld [vmem:[#allocation10 + $0x10] sm:$0xff]
    %v204 = vld [vmem:[#allocation10 + $0x18] sm:$0xff]
    %v205 = vld [vmem:[#allocation10 + $0x20] sm:$0xff]
    %v206 = vld [vmem:[#allocation10 + $0x28] sm:$0xff]
    %v207 = vld [vmem:[#allocation10 + $0x30] sm:$0xff]
    %v208 = vld [vmem:[#allocation10 + $0x38] sm:$0xff]
    %v209 = vld [vmem:[#allocation10 + $0x40] sm:$0xff]
    %v210 = vld [vmem:[#allocation10 + $0x48] sm:$0xff]
    %v211 = vld [vmem:[#allocation10 + $0x50] sm:$0xff]
    %v212 = vld [vmem:[#allocation10 + $0x58] sm:$0xff]
    %v213 = vld [vmem:[#allocation10 + $0x60] sm:$0xff]
    %v214 = vld [vmem:[#allocation10 + $0x68] sm:$0xff]
    %v215 = vld [vmem:[#allocation10 + $0x70] sm:$0xff]
    %v216 = vld [vmem:[#allocation10 + $0x78] sm:$0xff]
    %v217 = vld [vmem:[%s6] sm:$0x1]
    %v219 = vlaneseq
    %v220 = vshrl.u32 %v219, 7
    %v221 = vsub.s32 0, %v220
    %v222 = vrot.slane %v217, %v221
    %224 = vmatprep.subr.mxu0 0.0
    %225 = vmatpush1.msra.mxu0 %v201
    %226 = vmatprep.subr.mxu0 0.0
    %227 = vmatpush1.msra.mxu0 %v202
    %228 = vmatprep.subr.mxu0 0.0
    %229 = vmatpush1.msra.mxu0 %v203
    %230 = vmatprep.subr.mxu0 0.0
    %231 = vmatpush1.msra.mxu0 %v204
    %232 = vmatprep.subr.mxu0 0.0
    %233 = vmatpush1.msra.mxu0 %v205
    %234 = vmatprep.subr.mxu0 0.0
    %235 = vmatpush1.msra.mxu0 %v206
    %236 = vmatprep.subr.mxu0 0.0
    %237 = vmatpush1.msra.mxu0 %v207
    %238 = vmatprep.subr.mxu0 0.0
    %239 = vmatpush1.msra.mxu0 %v208
    %240 = vmatprep.subr.mxu0 0.0
    %241 = vmatpush1.msra.mxu0 %v209
    %242 = vmatprep.subr.mxu0 0.0
    %243 = vmatpush1.msra.mxu0 %v210
    %244 = vmatprep.subr.mxu0 0.0
    %245 = vmatpush1.msra.mxu0 %v211
    %246 = vmatprep.subr.mxu0 0.0
    %247 = vmatpush1.msra.mxu0 %v212
    %248 = vmatprep.subr.mxu0 0.0
    %249 = vmatpush1.msra.mxu0 %v213
    %250 = vmatprep.subr.mxu0 0.0
    %251 = vmatpush1.msra.mxu0 %v214
    %252 = vmatprep.subr.mxu0 0.0
    %253 = vmatpush1.msra.mxu0 %v215
    %254 = vmatprep.subr.mxu0 0.0
    %255 = vmatpush1.msra.mxu0 %v216
    %256 = vmatprep.subr.mxu0 0.0
    %257 = vmatpush1.msra.mxu0 0.0
    %258 = vmatprep.subr.mxu0 0.0
    %259 = vmatpush1.msra.mxu0 0.0
    %260 = vmatprep.subr.mxu0 0.0
    %261 = vmatpush1.msra.mxu0 0.0
    %262 = vmatprep.subr.mxu0 0.0
    %263 = vmatpush1.msra.mxu0 0.0
    %264 = vmatprep.subr.mxu0 0.0
    %265 = vmatpush1.msra.mxu0 0.0
    %266 = vmatprep.subr.mxu0 0.0
    %267 = vmatpush1.msra.mxu0 0.0
    %268 = vmatprep.subr.mxu0 0.0
    %269 = vmatpush1.msra.mxu0 0.0
    %270 = vmatprep.subr.mxu0 0.0
    %271 = vmatpush1.msra.mxu0 0.0
    %272 = vmatprep.subr.mxu0 0.0
    %273 = vmatpush1.msra.mxu0 0.0
    %274 = vmatprep.subr.mxu0 0.0
    %275 = vmatpush1.msra.mxu0 0.0
    %276 = vmatprep.subr.mxu0 0.0
    %277 = vmatpush1.msra.mxu0 0.0
    %278 = vmatprep.subr.mxu0 0.0
    %279 = vmatpush1.msra.mxu0 0.0
    %280 = vmatprep.subr.mxu0 0.0
    %281 = vmatpush1.msra.mxu0 0.0
    %282 = vmatprep.subr.mxu0 0.0
    %283 = vmatpush1.msra.mxu0 0.0
    %284 = vmatprep.subr.mxu0 0.0
    %285 = vmatpush1.msra.mxu0 0.0
    %286 = vmatprep.subr.mxu0 0.0
    %287 = vmatpush1.msra.mxu0 0.0
    %288 = vmatprep.mubr.f32.mxu0 0.0
    %289 = vmatmul.mubr.f32.gmra.mrb[0].mxu0 %v199
    %v290 = vpop.f32.mrb[0].mxu0
    %v291 = vadd.f32 %v222, %v290
    %v292 = vpop.f32.mrb[0].mxu0
    %293 = vmatprep.mubr.f32.mxu0 0.0
    %294 = vmatmul.mubr.f32.gmra.mrb[0].mxu0 %v200
    %v295 = vpop.f32.mrb[0].mxu0
    %v296 = vadd.f32 %v222, %v295
    %v297 = vpop.f32.mrb[0].mxu0
    %298 = vdwg.mxu0
    %300 = vset.pattern.permute.xlu0 0
    %301 = vperm.xlu0 %300, %v99
    %v302 = vpop.permute.xlu0 %301
    %305 = vset.pattern.permute.xlu0 0
    %306 = vperm.xlu0 %305, %v100
    %v307 = vpop.permute.xlu0 %306
    %v309 = vlaneseq
    %v310 = vshrl.u32 %v309, 7
    %v311 = vsub.s32 0, %v310
    %v312 = vrot.slane %v291, %v311
    %v313 = vlaneseq
    %v314 = vshrl.u32 %v313, 7
    %v315 = vsub.s32 0, %v314
    %v316 = vrot.slane %v296, %v315
    %v317 = vmul.f32 %v302, %v312
    %v318 = vmul.f32 %v307, %v316
    %v319 = vadd.f32 %v317, 0.0
    %v320 = vadd.f32 %v318, 0.0
    %321 = vset.pattern.permute.xlu0 1
    %322 = vperm.xlu0 %321, %v99
    %v323 = vpop.permute.xlu0 %322
    %325 = vset.pattern.permute.xlu0 1
    %326 = vperm.xlu0 %325, %v100
    %v327 = vpop.permute.xlu0 %326
    %v329 = vlaneseq
    %v330 = vshrl.u32 %v329, 7
    %v331 = vsub.s32 1, %v330
    %v332 = vrot.slane %v291, %v331
    %v333 = vlaneseq
    %v334 = vshrl.u32 %v333, 7
    %v335 = vsub.s32 1, %v334
    %v336 = vrot.slane %v296, %v335
    %v337 = vmul.f32 %v323, %v332
    %v338 = vmul.f32 %v327, %v336
    %v339 = vadd.f32 %v319, %v337
    %v340 = vadd.f32 %v320, %v338
    %341 = vset.pattern.permute.xlu0 2
    %342 = vperm.xlu0 %341, %v99
    %v343 = vpop.permute.xlu0 %342
    %345 = vset.pattern.permute.xlu0 2
    %346 = vperm.xlu0 %345, %v100
    %v347 = vpop.permute.xlu0 %346
    %v349 = vlaneseq
    %v350 = vshrl.u32 %v349, 7
    %v351 = vsub.s32 2, %v350
    %v352 = vrot.slane %v291, %v351
    %v353 = vlaneseq
    %v354 = vshrl.u32 %v353, 7
    %v355 = vsub.s32 2, %v354
    %v356 = vrot.slane %v296, %v355
    %v357 = vmul.f32 %v343, %v352
    %v358 = vmul.f32 %v347, %v356
    %v359 = vadd.f32 %v339, %v357
    %v360 = vadd.f32 %v340, %v358
    %361 = vset.pattern.permute.xlu0 3
    %362 = vperm.xlu0 %361, %v99
    %v363 = vpop.permute.xlu0 %362
    %365 = vset.pattern.permute.xlu0 3
    %366 = vperm.xlu0 %365, %v100
    %v367 = vpop.permute.xlu0 %366
    %v369 = vlaneseq
    %v370 = vshrl.u32 %v369, 7
    %v371 = vsub.s32 3, %v370
    %v372 = vrot.slane %v291, %v371
    %v373 = vlaneseq
    %v374 = vshrl.u32 %v373, 7
    %v375 = vsub.s32 3, %v374
    %v376 = vrot.slane %v296, %v375
    %v377 = vmul.f32 %v363, %v372
    %v378 = vmul.f32 %v367, %v376
    %v379 = vadd.f32 %v359, %v377
    %v380 = vadd.f32 %v360, %v378
    %381 = vset.pattern.permute.xlu0 4
    %382 = vperm.xlu0 %381, %v99
    %v383 = vpop.permute.xlu0 %382
    %385 = vset.pattern.permute.xlu0 4
    %386 = vperm.xlu0 %385, %v100
    %v387 = vpop.permute.xlu0 %386
    %v389 = vlaneseq
    %v390 = vshrl.u32 %v389, 7
    %v391 = vsub.s32 4, %v390
    %v392 = vrot.slane %v291, %v391
    %v393 = vlaneseq
    %v394 = vshrl.u32 %v393, 7
    %v395 = vsub.s32 4, %v394
    %v396 = vrot.slane %v296, %v395
    %v397 = vmul.f32 %v383, %v392
    %v398 = vmul.f32 %v387, %v396
    %v399 = vadd.f32 %v379, %v397
    %v400 = vadd.f32 %v380, %v398
    %401 = vset.pattern.permute.xlu0 5
    %402 = vperm.xlu0 %401, %v99
    %v403 = vpop.permute.xlu0 %402
    %405 = vset.pattern.permute.xlu0 5
    %406 = vperm.xlu0 %405, %v100
    %v407 = vpop.permute.xlu0 %406
    %v409 = vlaneseq
    %v410 = vshrl.u32 %v409, 7
    %v411 = vsub.s32 5, %v410
    %v412 = vrot.slane %v291, %v411
    %v413 = vlaneseq
    %v414 = vshrl.u32 %v413, 7
    %v415 = vsub.s32 5, %v414
    %v416 = vrot.slane %v296, %v415
    %v417 = vmul.f32 %v403, %v412
    %v418 = vmul.f32 %v407, %v416
    %v419 = vadd.f32 %v399, %v417
    %v420 = vadd.f32 %v400, %v418
    %421 = vset.pattern.permute.xlu0 6
    %422 = vperm.xlu0 %421, %v99
    %v423 = vpop.permute.xlu0 %422
    %425 = vset.pattern.permute.xlu0 6
    %426 = vperm.xlu0 %425, %v100
    %v427 = vpop.permute.xlu0 %426
    %v429 = vlaneseq
    %v430 = vshrl.u32 %v429, 7
    %v431 = vsub.s32 6, %v430
    %v432 = vrot.slane %v291, %v431
    %v433 = vlaneseq
    %v434 = vshrl.u32 %v433, 7
    %v435 = vsub.s32 6, %v434
    %v436 = vrot.slane %v296, %v435
    %v437 = vmul.f32 %v423, %v432
    %v438 = vmul.f32 %v427, %v436
    %v439 = vadd.f32 %v419, %v437
    %v440 = vadd.f32 %v420, %v438
    %441 = vset.pattern.permute.xlu0 7
    %442 = vperm.xlu0 %441, %v99
    %v443 = vpop.permute.xlu0 %442
    %445 = vset.pattern.permute.xlu0 7
    %446 = vperm.xlu0 %445, %v100
    %v447 = vpop.permute.xlu0 %446
    %v449 = vlaneseq
    %v450 = vshrl.u32 %v449, 7
    %v451 = vsub.s32 7, %v450
    %v452 = vrot.slane %v291, %v451
    %v453 = vlaneseq
    %v454 = vshrl.u32 %v453, 7
    %v455 = vsub.s32 7, %v454
    %v456 = vrot.slane %v296, %v455
    %v457 = vmul.f32 %v443, %v452
    %v458 = vmul.f32 %v447, %v456
    %v459 = vadd.f32 %v439, %v457
    %v460 = vadd.f32 %v440, %v458
    %v461 = vadd.f32 %v191, %v459
    %v462 = vadd.f32 %v196, %v460
    %v463 = vadd.f32 %v461, %v95
    %v464 = vadd.f32 %v462, %v96
    %v465 = vtanh.pop %v463
    %v466 = vtanh.pop %v464
    %s467 = scalar_lea.vmem [#allocation8], 128
    %v468 = vld [vmem:[%s467] sm:$0xff]
    %v469 = vld [vmem:[%s467 + $0x8] sm:$0xff]
    %v470 = vld [vmem:[%s467 + $0x10] sm:$0xff]
    %v471 = vld [vmem:[%s467 + $0x18] sm:$0xff]
    %v472 = vld [vmem:[%s467 + $0x20] sm:$0xff]
    %v473 = vld [vmem:[%s467 + $0x28] sm:$0xff]
    %v474 = vld [vmem:[%s467 + $0x30] sm:$0xff]
    %v475 = vld [vmem:[%s467 + $0x38] sm:$0xff]
    %v476 = vld [vmem:[%s467 + $0x40] sm:$0xff]
    %v477 = vld [vmem:[%s467 + $0x48] sm:$0xff]
    %v478 = vld [vmem:[%s467 + $0x50] sm:$0xff]
    %v479 = vld [vmem:[%s467 + $0x58] sm:$0xff]
    %v480 = vld [vmem:[%s467 + $0x60] sm:$0xff]
    %v481 = vld [vmem:[%s467 + $0x68] sm:$0xff]
    %v482 = vld [vmem:[%s467 + $0x70] sm:$0xff]
    %v483 = vld [vmem:[%s467 + $0x78] sm:$0xff]
    %s484 = scalar_lea.vmem %s4, 1
    %v485 = vld [vmem:[%s484] sm:$0x1]
    %v487 = vlaneseq
    %v488 = vshrl.u32 %v487, 7
    %v489 = vsub.s32 0, %v488
    %v490 = vrot.slane %v485, %v489
    %492 = vmatprep.subr.mxu0 0.0
    %493 = vmatpush1.msra.mxu0 %v468
    %494 = vmatprep.subr.mxu0 0.0
    %495 = vmatpush1.msra.mxu0 %v469
    %496 = vmatprep.subr.mxu0 0.0
    %497 = vmatpush1.msra.mxu0 %v470
    %498 = vmatprep.subr.mxu0 0.0
    %499 = vmatpush1.msra.mxu0 %v471
    %500 = vmatprep.subr.mxu0 0.0
    %501 = vmatpush1.msra.mxu0 %v472
    %502 = vmatprep.subr.mxu0 0.0
    %503 = vmatpush1.msra.mxu0 %v473
    %504 = vmatprep.subr.mxu0 0.0
    %505 = vmatpush1.msra.mxu0 %v474
    %506 = vmatprep.subr.mxu0 0.0
    %507 = vmatpush1.msra.mxu0 %v475
    %508 = vmatprep.subr.mxu0 0.0
    %509 = vmatpush1.msra.mxu0 %v476
    %510 = vmatprep.subr.mxu0 0.0
    %511 = vmatpush1.msra.mxu0 %v477
    %512 = vmatprep.subr.mxu0 0.0
    %513 = vmatpush1.msra.mxu0 %v478
    %514 = vmatprep.subr.mxu0 0.0
    %515 = vmatpush1.msra.mxu0 %v479
    %516 = vmatprep.subr.mxu0 0.0
    %517 = vmatpush1.msra.mxu0 %v480
    %518 = vmatprep.subr.mxu0 0.0
    %519 = vmatpush1.msra.mxu0 %v481
    %520 = vmatprep.subr.mxu0 0.0
    %521 = vmatpush1.msra.mxu0 %v482
    %522 = vmatprep.subr.mxu0 0.0
    %523 = vmatpush1.msra.mxu0 %v483
    %524 = vmatprep.subr.mxu0 0.0
    %525 = vmatpush1.msra.mxu0 0.0
    %526 = vmatprep.subr.mxu0 0.0
    %527 = vmatpush1.msra.mxu0 0.0
    %528 = vmatprep.subr.mxu0 0.0
    %529 = vmatpush1.msra.mxu0 0.0
    %530 = vmatprep.subr.mxu0 0.0
    %531 = vmatpush1.msra.mxu0 0.0
    %532 = vmatprep.subr.mxu0 0.0
    %533 = vmatpush1.msra.mxu0 0.0
    %534 = vmatprep.subr.mxu0 0.0
    %535 = vmatpush1.msra.mxu0 0.0
    %536 = vmatprep.subr.mxu0 0.0
    %537 = vmatpush1.msra.mxu0 0.0
    %538 = vmatprep.subr.mxu0 0.0
    %539 = vmatpush1.msra.mxu0 0.0
    %540 = vmatprep.subr.mxu0 0.0
    %541 = vmatpush1.msra.mxu0 0.0
    %542 = vmatprep.subr.mxu0 0.0
    %543 = vmatpush1.msra.mxu0 0.0
    %544 = vmatprep.subr.mxu0 0.0
    %545 = vmatpush1.msra.mxu0 0.0
    %546 = vmatprep.subr.mxu0 0.0
    %547 = vmatpush1.msra.mxu0 0.0
    %548 = vmatprep.subr.mxu0 0.0
    %549 = vmatpush1.msra.mxu0 0.0
    %550 = vmatprep.subr.mxu0 0.0
    %551 = vmatpush1.msra.mxu0 0.0
    %552 = vmatprep.subr.mxu0 0.0
    %553 = vmatpush1.msra.mxu0 0.0
    %554 = vmatprep.subr.mxu0 0.0
    %555 = vmatpush1.msra.mxu0 0.0
    %556 = vmatprep.mubr.f32.mxu0 0.0
    %557 = vmatmul.mubr.f32.gmra.mrb[0].mxu0 %v465
    %v558 = vpop.f32.mrb[0].mxu0
    %v559 = vadd.f32 %v490, %v558
    %v560 = vpop.f32.mrb[0].mxu0
    %561 = vmatprep.mubr.f32.mxu0 0.0
    %562 = vmatmul.mubr.f32.gmra.mrb[0].mxu0 %v466
    %v563 = vpop.f32.mrb[0].mxu0
    %v564 = vadd.f32 %v490, %v563
    %v565 = vpop.f32.mrb[0].mxu0
    %566 = vdwg.mxu0
    %v567 = vmul.f32 %v465, %v97
    %v568 = vmul.f32 %v466, %v98
    %s569 = scalar_lea.vmem [#allocation10], 128
    %v570 = vld [vmem:[%s569] sm:$0xff]
    %v571 = vld [vmem:[%s569 + $0x8] sm:$0xff]
    %v572 = vld [vmem:[%s569 + $0x10] sm:$0xff]
    %v573 = vld [vmem:[%s569 + $0x18] sm:$0xff]
    %v574 = vld [vmem:[%s569 + $0x20] sm:$0xff]
    %v575 = vld [vmem:[%s569 + $0x28] sm:$0xff]
    %v576 = vld [vmem:[%s569 + $0x30] sm:$0xff]
    %v577 = vld [vmem:[%s569 + $0x38] sm:$0xff]
    %v578 = vld [vmem:[%s569 + $0x40] sm:$0xff]
    %v579 = vld [vmem:[%s569 + $0x48] sm:$0xff]
    %v580 = vld [vmem:[%s569 + $0x50] sm:$0xff]
    %v581 = vld [vmem:[%s569 + $0x58] sm:$0xff]
    %v582 = vld [vmem:[%s569 + $0x60] sm:$0xff]
    %v583 = vld [vmem:[%s569 + $0x68] sm:$0xff]
    %v584 = vld [vmem:[%s569 + $0x70] sm:$0xff]
    %v585 = vld [vmem:[%s569 + $0x78] sm:$0xff]
    %s586 = scalar_lea.vmem %s6, 1
    %v587 = vld [vmem:[%s586] sm:$0x1]
    %v589 = vlaneseq
    %v590 = vshrl.u32 %v589, 7
    %v591 = vsub.s32 0, %v590
    %v592 = vrot.slane %v587, %v591
    %594 = vmatprep.subr.mxu0 0.0
    %595 = vmatpush1.msra.mxu0 %v570
    %596 = vmatprep.subr.mxu0 0.0
    %597 = vmatpush1.msra.mxu0 %v571
    %598 = vmatprep.subr.mxu0 0.0
    %599 = vmatpush1.msra.mxu0 %v572
    %600 = vmatprep.subr.mxu0 0.0
    %601 = vmatpush1.msra.mxu0 %v573
    %602 = vmatprep.subr.mxu0 0.0
    %603 = vmatpush1.msra.mxu0 %v574
    %604 = vmatprep.subr.mxu0 0.0
    %605 = vmatpush1.msra.mxu0 %v575
    %606 = vmatprep.subr.mxu0 0.0
    %607 = vmatpush1.msra.mxu0 %v576
    %608 = vmatprep.subr.mxu0 0.0
    %609 = vmatpush1.msra.mxu0 %v577
    %610 = vmatprep.subr.mxu0 0.0
    %611 = vmatpush1.msra.mxu0 %v578
    %612 = vmatprep.subr.mxu0 0.0
    %613 = vmatpush1.msra.mxu0 %v579
    %614 = vmatprep.subr.mxu0 0.0
    %615 = vmatpush1.msra.mxu0 %v580
    %616 = vmatprep.subr.mxu0 0.0
    %617 = vmatpush1.msra.mxu0 %v581
    %618 = vmatprep.subr.mxu0 0.0
    %619 = vmatpush1.msra.mxu0 %v582
    %620 = vmatprep.subr.mxu0 0.0
    %621 = vmatpush1.msra.mxu0 %v583
    %622 = vmatprep.subr.mxu0 0.0
    %623 = vmatpush1.msra.mxu0 %v584
    %624 = vmatprep.subr.mxu0 0.0
    %625 = vmatpush1.msra.mxu0 %v585
    %626 = vmatprep.subr.mxu0 0.0
    %627 = vmatpush1.msra.mxu0 0.0
    %628 = vmatprep.subr.mxu0 0.0
    %629 = vmatpush1.msra.mxu0 0.0
    %630 = vmatprep.subr.mxu0 0.0
    %631 = vmatpush1.msra.mxu0 0.0
    %632 = vmatprep.subr.mxu0 0.0
    %633 = vmatpush1.msra.mxu0 0.0
    %634 = vmatprep.subr.mxu0 0.0
    %635 = vmatpush1.msra.mxu0 0.0
    %636 = vmatprep.subr.mxu0 0.0
    %637 = vmatpush1.msra.mxu0 0.0
    %638 = vmatprep.subr.mxu0 0.0
    %639 = vmatpush1.msra.mxu0 0.0
    %640 = vmatprep.subr.mxu0 0.0
    %641 = vmatpush1.msra.mxu0 0.0
    %642 = vmatprep.subr.mxu0 0.0
    %643 = vmatpush1.msra.mxu0 0.0
    %644 = vmatprep.subr.mxu0 0.0
    %645 = vmatpush1.msra.mxu0 0.0
    %646 = vmatprep.subr.mxu0 0.0
    %647 = vmatpush1.msra.mxu0 0.0
    %648 = vmatprep.subr.mxu0 0.0
    %649 = vmatpush1.msra.mxu0 0.0
    %650 = vmatprep.subr.mxu0 0.0
    %651 = vmatpush1.msra.mxu0 0.0
    %652 = vmatprep.subr.mxu0 0.0
    %653 = vmatpush1.msra.mxu0 0.0
    %654 = vmatprep.subr.mxu0 0.0
    %655 = vmatpush1.msra.mxu0 0.0
    %656 = vmatprep.subr.mxu0 0.0
    %657 = vmatpush1.msra.mxu0 0.0
    %658 = vmatprep.mubr.f32.mxu0 0.0
    %659 = vmatmul.mubr.f32.gmra.mrb[0].mxu0 %v567
    %v660 = vpop.f32.mrb[0].mxu0
    %v661 = vadd.f32 %v592, %v660
    %v662 = vpop.f32.mrb[0].mxu0
    %663 = vmatprep.mubr.f32.mxu0 0.0
    %664 = vmatmul.mubr.f32.gmra.mrb[0].mxu0 %v568
    %v665 = vpop.f32.mrb[0].mxu0
    %v666 = vadd.f32 %v592, %v665
    %v667 = vpop.f32.mrb[0].mxu0
    %668 = vdwg.mxu0
    %v669 = vlaneseq
    %v670 = vshrl.u32 %v669, 7
    %v671 = vsub.s32 0, %v670
    %v672 = vrot.slane %v661, %v671
    %v673 = vlaneseq
    %v674 = vshrl.u32 %v673, 7
    %v675 = vsub.s32 0, %v674
    %v676 = vrot.slane %v666, %v675
    %v677 = vmul.f32 %v302, %v672
    %v678 = vmul.f32 %v307, %v676
    %v679 = vadd.f32 %v677, 0.0
    %v680 = vadd.f32 %v678, 0.0
    %v681 = vlaneseq
    %v682 = vshrl.u32 %v681, 7
    %v683 = vsub.s32 1, %v682
    %v684 = vrot.slane %v661, %v683
    %v685 = vlaneseq
    %v686 = vshrl.u32 %v685, 7
    %v687 = vsub.s32 1, %v686
    %v688 = vrot.slane %v666, %v687
    %v689 = vmul.f32 %v323, %v684
    %v690 = vmul.f32 %v327, %v688
    %v691 = vadd.f32 %v679, %v689
    %v692 = vadd.f32 %v680, %v690
    %v693 = vlaneseq
    %v694 = vshrl.u32 %v693, 7
    %v695 = vsub.s32 2, %v694
    %v696 = vrot.slane %v661, %v695
    %v697 = vlaneseq
    %v698 = vshrl.u32 %v697, 7
    %v699 = vsub.s32 2, %v698
    %v700 = vrot.slane %v666, %v699
    %v701 = vmul.f32 %v343, %v696
    %v702 = vmul.f32 %v347, %v700
    %v703 = vadd.f32 %v691, %v701
    %v704 = vadd.f32 %v692, %v702
    %v705 = vlaneseq
    %v706 = vshrl.u32 %v705, 7
    %v707 = vsub.s32 3, %v706
    %v708 = vrot.slane %v661, %v707
    %v709 = vlaneseq
    %v710 = vshrl.u32 %v709, 7
    %v711 = vsub.s32 3, %v710
    %v712 = vrot.slane %v666, %v711
    %v713 = vmul.f32 %v363, %v708
    %v714 = vmul.f32 %v367, %v712
    %v715 = vadd.f32 %v703, %v713
    %v716 = vadd.f32 %v704, %v714
    %v717 = vlaneseq
    %v718 = vshrl.u32 %v717, 7
    %v719 = vsub.s32 4, %v718
    %v720 = vrot.slane %v661, %v719
    %v721 = vlaneseq
    %v722 = vshrl.u32 %v721, 7
    %v723 = vsub.s32 4, %v722
    %v724 = vrot.slane %v666, %v723
    %v725 = vmul.f32 %v383, %v720
    %v726 = vmul.f32 %v387, %v724
    %v727 = vadd.f32 %v715, %v725
    %v728 = vadd.f32 %v716, %v726
    %v729 = vlaneseq
    %v730 = vshrl.u32 %v729, 7
    %v731 = vsub.s32 5, %v730
    %v732 = vrot.slane %v661, %v731
    %v733 = vlaneseq
    %v734 = vshrl.u32 %v733, 7
    %v735 = vsub.s32 5, %v734
    %v736 = vrot.slane %v666, %v735
    %v737 = vmul.f32 %v403, %v732
    %v738 = vmul.f32 %v407, %v736
    %v739 = vadd.f32 %v727, %v737
    %v740 = vadd.f32 %v728, %v738
    %v741 = vlaneseq
    %v742 = vshrl.u32 %v741, 7
    %v743 = vsub.s32 6, %v742
    %v744 = vrot.slane %v661, %v743
    %v745 = vlaneseq
    %v746 = vshrl.u32 %v745, 7
    %v747 = vsub.s32 6, %v746
    %v748 = vrot.slane %v666, %v747
    %v749 = vmul.f32 %v423, %v744
    %v750 = vmul.f32 %v427, %v748
    %v751 = vadd.f32 %v739, %v749
    %v752 = vadd.f32 %v740, %v750
    %v753 = vlaneseq
    %v754 = vshrl.u32 %v753, 7
    %v755 = vsub.s32 7, %v754
    %v756 = vrot.slane %v661, %v755
    %v757 = vlaneseq
    %v758 = vshrl.u32 %v757, 7
    %v759 = vsub.s32 7, %v758
    %v760 = vrot.slane %v666, %v759
    %v761 = vmul.f32 %v443, %v756
    %v762 = vmul.f32 %v447, %v760
    %v763 = vadd.f32 %v751, %v761
    %v764 = vadd.f32 %v752, %v762
    %v765 = vadd.f32 %v559, %v763
    %v766 = vadd.f32 %v564, %v764
    %v767 = vadd.f32 %v765, %v465
    %v768 = vadd.f32 %v766, %v466
    %v769 = vtanh.pop %v767
    %v770 = vtanh.pop %v768
    %771 = vst [vmem:[#allocation11] sm:$0xff] %v769
    %772 = vst [vmem:[#allocation11 + $0x8] sm:$0xff] %v770
    // Predicated region
    $region50: #{tpu_custom_call.1} parent=1 // pred_check
      _
    $region51: #{tpu_custom_call.1} parent=1 // pred_check_branch
      %774 = sbr.rel (0) target = $region53
    $region52: #{tpu_custom_call.1} parent=1 // pred_region
      %s776 = ssub.s32 256, 256
      %777 = vsyncadd [#allocation4], %s776
      %s778 = sshll.u32 [#allocation11], 4
      %s779 = int_to_ptr.vmem [resolvable:$true] %s778
      %784 = dma.vmem_to_hbm [thread:$0]  %s779, 256, %s7, [#allocation4], 128, 128, 8
    $region53: #{tpu_custom_call.1} parent=1 // pred_fallthru
      _
    // Predicated region
    $region54: #{tpu_custom_call.1} parent=1 // pred_check
      _
    $region55: #{tpu_custom_call.1} parent=1 // pred_check_branch
      %786 = sbr.rel (0) target = $region57
    $region56: #{tpu_custom_call.1} parent=1 // pred_region
      %787 = dma.done [#allocation4], 256
    $region57: #{tpu_custom_call.1} parent=1 // pred_fallthru
      _
    %788 = vsyncpa [#allocation3], 1
    %789 = vsyncpa [#allocation6], 1
    %790 = vsyncpa [#allocation9], 1
    %791 = vsyncpa [#allocation4], 1

// kernel: tpu_custom_call.1
$region0: #{tpu_custom_call.1}
  #allocation0 [shape = 'u32[]', space=smem, size = 0x4, offset = 0x4, fixed_abs, tag = 'smem constant byte address 0x4 - core index']
  #allocation1 [shape = 'u32[144,128]{1,0:T(1,128)}', space=vmem, size = 0x12000, scoped, tag = 'internal scratch']
  %s0 = inlined_call_operand.hbm [shape: f32[2,8,128], index: 0, kind: input, shape index: {}]
  %s1 = inlined_call_operand.hbm [shape: f32[2,8,128], index: 1, kind: input, shape index: {}]
  %s2 = inlined_call_operand.hbm [shape: f32[2,8,8], index: 2, kind: input, shape index: {}]
  %s3 = inlined_call_operand.hbm [shape: f32[2,128,128], index: 3, kind: input, shape index: {}]
  %s4 = inlined_call_operand.vmem [shape: f32[2,1,128], index: 4, kind: input, shape index: {}]
  %s5 = inlined_call_operand.hbm [shape: f32[2,128,128], index: 5, kind: input, shape index: {}]
  %s6 = inlined_call_operand.vmem [shape: f32[2,1,128], index: 6, kind: input, shape index: {}]
  %s7 = inlined_call_operand.hbm [shape: f32[2,8,128], index: 7, kind: output, shape index: {}]
  %s8 = sld [smem:[#allocation0]]
  $region58: #{tpu_custom_call.1} parent=0
    _
  %s10 = ssub.s32 1, %s8
  %s11 = scalar_select 0, %s10, %s8
  $region1: #{tpu_custom_call.1} parent=0
    #allocation2 [shape = 'u8[8192]{0}', space=vmem, size = 0x2000, scoped, tag = 'input window, operand 0, single buffered']
    #allocation3 [shape = 's32[1]{0}', space=sflag, size = 0x4, scoped, tag = 'scoped memory for tpu_custom_call.1']
    #allocation4 [shape = 's32[1]{0}', space=sflag, size = 0x4, scoped, tag = 'scoped memory for tpu_custom_call.1']
    #allocation5 [shape = 'u8[8192]{0}', space=vmem, size = 0x2000, scoped, tag = 'input window, operand 1, single buffered']
    #allocation6 [shape = 's32[1]{0}', space=sflag, size = 0x4, scoped, tag = 'scoped memory for tpu_custom_call.1']
    #allocation7 [shape = 'u8[8192]{0}', space=vmem, size = 0x2000, scoped, tag = 'input window, operand 2, single buffered']
    #allocation8 [shape = 'u8[131072]{0}', space=vmem, size = 0x20000, scoped, tag = 'input window, operand 3, single buffered']
    #allocation9 [shape = 's32[1]{0}', space=sflag, size = 0x4, scoped, tag = 'scoped memory for tpu_custom_call.1']
    #allocation10 [shape = 'u8[131072]{0}', space=vmem, size = 0x20000, scoped, tag = 'input window, operand 5, single buffered']
    #allocation11 [shape = 'u8[8192]{0}', space=vmem, size = 0x2000, scoped, tag = 'output window, operand 0, single buffered']
    %12 = vsyncpa [#allocation3], 0
    %13 = vsyncpa [#allocation6], 0
    %14 = vsyncpa [#allocation9], 0
    %15 = vsyncpa [#allocation4], 0
    // Predicated region
    $region2: #{tpu_custom_call.1} parent=1 // pred_check
      _
    $region3: #{tpu_custom_call.1} parent=1 // pred_check_branch
      %17 = sbr.rel (0) target = $region5
    $region4: #{tpu_custom_call.1} parent=1 // pred_region
      %s19 = ssub.s32 256, 256
      %20 = vsyncadd [#allocation3], %s19
      %s21 = sshll.u32 [#allocation2], 4
      %s22 = int_to_ptr.vmem [resolvable:$true] %s21
      %27 = dma.hbm_to_vmem [thread:$0]  %s0, 256, %s22, [#allocation3], 128, 128, 8
    $region5: #{tpu_custom_call.1} parent=1 // pred_fallthru
      _
    // Predicated region
    $region6: #{tpu_custom_call.1} parent=1 // pred_check
      _
    $region7: #{tpu_custom_call.1} parent=1 // pred_check_branch
      %29 = sbr.rel (0) target = $region9
    $region8: #{tpu_custom_call.1} parent=1 // pred_region
      %s31 = ssub.s32 256, 256
      %32 = vsyncadd [#allocation6], %s31
      %s33 = sshll.u32 [#allocation5], 4
      %s34 = int_to_ptr.vmem [resolvable:$true] %s33
      %39 = dma.hbm_to_vmem [thread:$0]  %s1, 256, %s34, [#allocation6], 128, 128, 8
    $region9: #{tpu_custom_call.1} parent=1 // pred_fallthru
      _
    // Predicated region
    $region10: #{tpu_custom_call.1} parent=1 // pred_check
      _
    $region11: #{tpu_custom_call.1} parent=1 // pred_check_branch
      %41 = sbr.rel (0) target = $region13
    $region12: #{tpu_custom_call.1} parent=1 // pred_region
      %s43 = ssub.s32 256, 256
      %44 = vsyncadd [#allocation6], %s43
      %s45 = sshll.u32 [#allocation7], 4
      %s46 = int_to_ptr.vmem [resolvable:$true] %s45
      %51 = dma.hbm_to_vmem [thread:$0]  %s2, 256, %s46, [#allocation6], 128, 128, 8
    $region13: #{tpu_custom_call.1} parent=1 // pred_fallthru
      _
    // Predicated region
    $region14: #{tpu_custom_call.1} parent=1 // pred_check
      _
    $region15: #{tpu_custom_call.1} parent=1 // pred_check_branch
      %53 = sbr.rel (0) target = $region17
    $region16: #{tpu_custom_call.1} parent=1 // pred_region
      %s55 = ssub.s32 4096, 4096
      %56 = vsyncadd [#allocation9], %s55
      %s57 = sshll.u32 [#allocation8], 4
      %s58 = int_to_ptr.vmem [resolvable:$true] %s57
      %63 = dma.hbm_to_vmem [thread:$0]  %s3, 4096, %s58, [#allocation9], 128, 128, 8
    $region17: #{tpu_custom_call.1} parent=1 // pred_fallthru
      _
    // Predicated region
    $region18: #{tpu_custom_call.1} parent=1 // pred_check
      _
    $region19: #{tpu_custom_call.1} parent=1 // pred_check_branch
      %65 = sbr.rel (0) target = $region21
    $region20: #{tpu_custom_call.1} parent=1 // pred_region
      _
    $region21: #{tpu_custom_call.1} parent=1 // pred_fallthru
      _
    // Predicated region
    $region22: #{tpu_custom_call.1} parent=1 // pred_check
      _
    $region23: #{tpu_custom_call.1} parent=1 // pred_check_branch
      %67 = sbr.rel (0) target = $region25
    $region24: #{tpu_custom_call.1} parent=1 // pred_region
      %s69 = ssub.s32 4096, 4096
      %70 = vsyncadd [#allocation9], %s69
      %s71 = sshll.u32 [#allocation10], 4
      %s72 = int_to_ptr.vmem [resolvable:$true] %s71
      %77 = dma.hbm_to_vmem [thread:$0]  %s5, 4096, %s72, [#allocation9], 128, 128, 8
    $region25: #{tpu_custom_call.1} parent=1 // pred_fallthru
      _
    // Predicated region
    $region26: #{tpu_custom_call.1} parent=1 // pred_check
      _
    $region27: #{tpu_custom_call.1} parent=1 // pred_check_branch
      %79 = sbr.rel (0) target = $region29
    $region28: #{tpu_custom_call.1} parent=1 // pred_region
      _
    $region29: #{tpu_custom_call.1} parent=1 // pred_fallthru
      _
    // Predicated region
    $region30: #{tpu_custom_call.1} parent=1 // pred_check
      _
    $region31: #{tpu_custom_call.1} parent=1 // pred_check_branch
      %81 = sbr.rel (0) target = $region33
    $region32: #{tpu_custom_call.1} parent=1 // pred_region
      %82 = dma.done [#allocation3], 256
    $region33: #{tpu_custom_call.1} parent=1 // pred_fallthru
      _
    // Predicated region
    $region34: #{tpu_custom_call.1} parent=1 // pred_check
      _
    $region35: #{tpu_custom_call.1} parent=1 // pred_check_branch
      %84 = sbr.rel (0) target = $region37
    $region36: #{tpu_custom_call.1} parent=1 // pred_region
      %85 = dma.done [#allocation6], 256
    $region37: #{tpu_custom_call.1} parent=1 // pred_fallthru
      _
    // Predicated region
    $region38: #{tpu_custom_call.1} parent=1 // pred_check
      _
    $region39: #{tpu_custom_call.1} parent=1 // pred_check_branch
      %87 = sbr.rel (0) target = $region41
    $region40: #{tpu_custom_call.1} parent=1 // pred_region
      %88 = dma.done [#allocation6], 256
    $region41: #{tpu_custom_call.1} parent=1 // pred_fallthru
      _
    // Predicated region
    $region42: #{tpu_custom_call.1} parent=1 // pred_check
      _
    $region43: #{tpu_custom_call.1} parent=1 // pred_check_branch
      %90 = sbr.rel (0) target = $region45
    $region44: #{tpu_custom_call.1} parent=1 // pred_region
      %91 = dma.done [#allocation9], 4096
    $region45: #{tpu_custom_call.1} parent=1 // pred_fallthru
      _
    // Predicated region
    $region46: #{tpu_custom_call.1} parent=1 // pred_check
      _
    $region47: #{tpu_custom_call.1} parent=1 // pred_check_branch
      %93 = sbr.rel (0) target = $region49
    $region48: #{tpu_custom_call.1} parent=1 // pred_region
      %94 = dma.done [#allocation9], 4096
    $region49: #{tpu_custom_call.1} parent=1 // pred_fallthru
      _
    %v95 = vld [vmem:[#allocation2] sm:$0xff]
    %v96 = vld [vmem:[#allocation2 + $0x8] sm:$0xff]
    %v97 = vld [vmem:[#allocation5] sm:$0xff]
    %v98 = vld [vmem:[#allocation5 + $0x8] sm:$0xff]
    %v99 = vld [vmem:[#allocation7] sm:$0xff]
    %v100 = vld [vmem:[#allocation7 + $0x8] sm:$0xff]
    %v101 = vld [vmem:[#allocation8] sm:$0xff]
    %v102 = vld [vmem:[#allocation8 + $0x8] sm:$0xff]
    %v103 = vld [vmem:[#allocation8 + $0x10] sm:$0xff]
    %v104 = vld [vmem:[#allocation8 + $0x18] sm:$0xff]
    %v105 = vld [vmem:[#allocation8 + $0x20] sm:$0xff]
    %v106 = vld [vmem:[#allocation8 + $0x28] sm:$0xff]
    %v107 = vld [vmem:[#allocation8 + $0x30] sm:$0xff]
    %v108 = vld [vmem:[#allocation8 + $0x38] sm:$0xff]
    %v109 = vld [vmem:[#allocation8 + $0x40] sm:$0xff]
    %v110 = vld [vmem:[#allocation8 + $0x48] sm:$0xff]
    %v111 = vld [vmem:[#allocation8 + $0x50] sm:$0xff]
    %v112 = vld [vmem:[#allocation8 + $0x58] sm:$0xff]
    %v113 = vld [vmem:[#allocation8 + $0x60] sm:$0xff]
    %v114 = vld [vmem:[#allocation8 + $0x68] sm:$0xff]
    %v115 = vld [vmem:[#allocation8 + $0x70] sm:$0xff]
    %v116 = vld [vmem:[#allocation8 + $0x78] sm:$0xff]
    %v117 = vld [vmem:[%s4] sm:$0x1]
    %v119 = vlaneseq
    %v120 = vshrl.u32 %v119, 7
    %v121 = vsub.s32 0, %v120
    %v122 = vrot.slane %v117, %v121
    %124 = vmatprep.subr.mxu0 0.0
    %125 = vmatpush1.msra.mxu0 %v101
    %126 = vmatprep.subr.mxu0 0.0
    %127 = vmatpush1.msra.mxu0 %v102
    %128 = vmatprep.subr.mxu0 0.0
    %129 = vmatpush1.msra.mxu0 %v103
    %130 = vmatprep.subr.mxu0 0.0
    %131 = vmatpush1.msra.mxu0 %v104
    %132 = vmatprep.subr.mxu0 0.0
    %133 = vmatpush1.msra.mxu0 %v105
    %134 = vmatprep.subr.mxu0 0.0
    %135 = vmatpush1.msra.mxu0 %v106
    %136 = vmatprep.subr.mxu0 0.0
    %137 = vmatpush1.msra.mxu0 %v107
    %138 = vmatprep.subr.mxu0 0.0
    %139 = vmatpush1.msra.mxu0 %v108
    %140 = vmatprep.subr.mxu0 0.0
    %141 = vmatpush1.msra.mxu0 %v109
    %142 = vmatprep.subr.mxu0 0.0
    %143 = vmatpush1.msra.mxu0 %v110
    %144 = vmatprep.subr.mxu0 0.0
    %145 = vmatpush1.msra.mxu0 %v111
    %146 = vmatprep.subr.mxu0 0.0
    %147 = vmatpush1.msra.mxu0 %v112
    %148 = vmatprep.subr.mxu0 0.0
    %149 = vmatpush1.msra.mxu0 %v113
    %150 = vmatprep.subr.mxu0 0.0
    %151 = vmatpush1.msra.mxu0 %v114
    %152 = vmatprep.subr.mxu0 0.0
    %153 = vmatpush1.msra.mxu0 %v115
    %154 = vmatprep.subr.mxu0 0.0
    %155 = vmatpush1.msra.mxu0 %v116
    %156 = vmatprep.subr.mxu0 0.0
    %157 = vmatpush1.msra.mxu0 0.0
    %158 = vmatprep.subr.mxu0 0.0
    %159 = vmatpush1.msra.mxu0 0.0
    %160 = vmatprep.subr.mxu0 0.0
    %161 = vmatpush1.msra.mxu0 0.0
    %162 = vmatprep.subr.mxu0 0.0
    %163 = vmatpush1.msra.mxu0 0.0
    %164 = vmatprep.subr.mxu0 0.0
    %165 = vmatpush1.msra.mxu0 0.0
    %166 = vmatprep.subr.mxu0 0.0
    %167 = vmatpush1.msra.mxu0 0.0
    %168 = vmatprep.subr.mxu0 0.0
    %169 = vmatpush1.msra.mxu0 0.0
    %170 = vmatprep.subr.mxu0 0.0
    %171 = vmatpush1.msra.mxu0 0.0
    %172 = vmatprep.subr.mxu0 0.0
    %173 = vmatpush1.msra.mxu0 0.0
    %174 = vmatprep.subr.mxu0 0.0
    %175 = vmatpush1.msra.mxu0 0.0
    %176 = vmatprep.subr.mxu0 0.0
    %177 = vmatpush1.msra.mxu0 0.0
    %178 = vmatprep.subr.mxu0 0.0
    %179 = vmatpush1.msra.mxu0 0.0
    %180 = vmatprep.subr.mxu0 0.0
    %181 = vmatpush1.msra.mxu0 0.0
    %182 = vmatprep.subr.mxu0 0.0
    %183 = vmatpush1.msra.mxu0 0.0
    %184 = vmatprep.subr.mxu0 0.0
    %185 = vmatpush1.msra.mxu0 0.0
    %186 = vmatprep.subr.mxu0 0.0
    %187 = vmatpush1.msra.mxu0 0.0
    %188 = vmatprep.mubr.f32.mxu0 0.0
    %189 = vmatmul.mubr.f32.gmra.mrb[0].mxu0 %v95
    %v190 = vpop.f32.mrb[0].mxu0
    %v191 = vadd.f32 %v122, %v190
    %v192 = vpop.f32.mrb[0].mxu0
    %193 = vmatprep.mubr.f32.mxu0 0.0
    %194 = vmatmul.mubr.f32.gmra.mrb[0].mxu0 %v96
    %v195 = vpop.f32.mrb[0].mxu0
    %v196 = vadd.f32 %v122, %v195
    %v197 = vpop.f32.mrb[0].mxu0
    %198 = vdwg.mxu0
    %v199 = vmul.f32 %v95, %v97
    %v200 = vmul.f32 %v96, %v98
    %v201 = vld [vmem:[#allocation10] sm:$0xff]
    %v202 = vld [vmem:[#allocation10 + $0x8] sm:$0xff]
    %v203 = vld [vmem:[#allocation10 + $0x10] sm:$0xff]
    %v204 = vld [vmem:[#allocation10 + $0x18] sm:$0xff]
    %v205 = vld [vmem:[#allocation10 + $0x20] sm:$0xff]
    %v206 = vld [vmem:[#allocation10 + $0x28] sm:$0xff]
    %v207 = vld [vmem:[#allocation10 + $0x30] sm:$0xff]
    %v208 = vld [vmem:[#allocation10 + $0x38] sm:$0xff]
    %v209 = vld [vmem:[#allocation10 + $0x40] sm:$0xff]
    %v210 = vld [vmem:[#allocation10 + $0x48] sm:$0xff]
    %v211 = vld [vmem:[#allocation10 + $0x50] sm:$0xff]
    %v212 = vld [vmem:[#allocation10 + $0x58] sm:$0xff]
    %v213 = vld [vmem:[#allocation10 + $0x60] sm:$0xff]
    %v214 = vld [vmem:[#allocation10 + $0x68] sm:$0xff]
    %v215 = vld [vmem:[#allocation10 + $0x70] sm:$0xff]
    %v216 = vld [vmem:[#allocation10 + $0x78] sm:$0xff]
    %v217 = vld [vmem:[%s6] sm:$0x1]
    %v219 = vlaneseq
    %v220 = vshrl.u32 %v219, 7
    %v221 = vsub.s32 0, %v220
    %v222 = vrot.slane %v217, %v221
    %224 = vmatprep.subr.mxu0 0.0
    %225 = vmatpush1.msra.mxu0 %v201
    %226 = vmatprep.subr.mxu0 0.0
    %227 = vmatpush1.msra.mxu0 %v202
    %228 = vmatprep.subr.mxu0 0.0
    %229 = vmatpush1.msra.mxu0 %v203
    %230 = vmatprep.subr.mxu0 0.0
    %231 = vmatpush1.msra.mxu0 %v204
    %232 = vmatprep.subr.mxu0 0.0
    %233 = vmatpush1.msra.mxu0 %v205
    %234 = vmatprep.subr.mxu0 0.0
    %235 = vmatpush1.msra.mxu0 %v206
    %236 = vmatprep.subr.mxu0 0.0
    %237 = vmatpush1.msra.mxu0 %v207
    %238 = vmatprep.subr.mxu0 0.0
    %239 = vmatpush1.msra.mxu0 %v208
    %240 = vmatprep.subr.mxu0 0.0
    %241 = vmatpush1.msra.mxu0 %v209
    %242 = vmatprep.subr.mxu0 0.0
    %243 = vmatpush1.msra.mxu0 %v210
    %244 = vmatprep.subr.mxu0 0.0
    %245 = vmatpush1.msra.mxu0 %v211
    %246 = vmatprep.subr.mxu0 0.0
    %247 = vmatpush1.msra.mxu0 %v212
    %248 = vmatprep.subr.mxu0 0.0
    %249 = vmatpush1.msra.mxu0 %v213
    %250 = vmatprep.subr.mxu0 0.0
    %251 = vmatpush1.msra.mxu0 %v214
    %252 = vmatprep.subr.mxu0 0.0
    %253 = vmatpush1.msra.mxu0 %v215
    %254 = vmatprep.subr.mxu0 0.0
    %255 = vmatpush1.msra.mxu0 %v216
    %256 = vmatprep.subr.mxu0 0.0
    %257 = vmatpush1.msra.mxu0 0.0
    %258 = vmatprep.subr.mxu0 0.0
    %259 = vmatpush1.msra.mxu0 0.0
    %260 = vmatprep.subr.mxu0 0.0
    %261 = vmatpush1.msra.mxu0 0.0
    %262 = vmatprep.subr.mxu0 0.0
    %263 = vmatpush1.msra.mxu0 0.0
    %264 = vmatprep.subr.mxu0 0.0
    %265 = vmatpush1.msra.mxu0 0.0
    %266 = vmatprep.subr.mxu0 0.0
    %267 = vmatpush1.msra.mxu0 0.0
    %268 = vmatprep.subr.mxu0 0.0
    %269 = vmatpush1.msra.mxu0 0.0
    %270 = vmatprep.subr.mxu0 0.0
    %271 = vmatpush1.msra.mxu0 0.0
    %272 = vmatprep.subr.mxu0 0.0
    %273 = vmatpush1.msra.mxu0 0.0
    %274 = vmatprep.subr.mxu0 0.0
    %275 = vmatpush1.msra.mxu0 0.0
    %276 = vmatprep.subr.mxu0 0.0
    %277 = vmatpush1.msra.mxu0 0.0
    %278 = vmatprep.subr.mxu0 0.0
    %279 = vmatpush1.msra.mxu0 0.0
    %280 = vmatprep.subr.mxu0 0.0
    %281 = vmatpush1.msra.mxu0 0.0
    %282 = vmatprep.subr.mxu0 0.0
    %283 = vmatpush1.msra.mxu0 0.0
    %284 = vmatprep.subr.mxu0 0.0
    %285 = vmatpush1.msra.mxu0 0.0
    %286 = vmatprep.subr.mxu0 0.0
    %287 = vmatpush1.msra.mxu0 0.0
    %288 = vmatprep.mubr.f32.mxu0 0.0
    %289 = vmatmul.mubr.f32.gmra.mrb[0].mxu0 %v199
    %v290 = vpop.f32.mrb[0].mxu0
    %v291 = vadd.f32 %v222, %v290
    %v292 = vpop.f32.mrb[0].mxu0
    %293 = vmatprep.mubr.f32.mxu0 0.0
    %294 = vmatmul.mubr.f32.gmra.mrb[0].mxu0 %v200
    %v295 = vpop.f32.mrb[0].mxu0
    %v296 = vadd.f32 %v222, %v295
    %v297 = vpop.f32.mrb[0].mxu0
    %298 = vdwg.mxu0
    %300 = vset.pattern.permute.xlu0 0
    %301 = vperm.xlu0 %300, %v99
    %v302 = vpop.permute.xlu0 %301
    %305 = vset.pattern.permute.xlu0 0
    %306 = vperm.xlu0 %305, %v100
    %v307 = vpop.permute.xlu0 %306
    %v309 = vlaneseq
    %v310 = vshrl.u32 %v309, 7
    %v311 = vsub.s32 0, %v310
    %v312 = vrot.slane %v291, %v311
    %v313 = vlaneseq
    %v314 = vshrl.u32 %v313, 7
    %v315 = vsub.s32 0, %v314
    %v316 = vrot.slane %v296, %v315
    %v317 = vmul.f32 %v302, %v312
    %v318 = vmul.f32 %v307, %v316
    %v319 = vadd.f32 %v317, 0.0
    %v320 = vadd.f32 %v318, 0.0
    %321 = vset.pattern.permute.xlu0 1
    %322 = vperm.xlu0 %321, %v99
    %v323 = vpop.permute.xlu0 %322
    %325 = vset.pattern.permute.xlu0 1
    %326 = vperm.xlu0 %325, %v100
    %v327 = vpop.permute.xlu0 %326
    %v329 = vlaneseq
    %v330 = vshrl.u32 %v329, 7
    %v331 = vsub.s32 1, %v330
    %v332 = vrot.slane %v291, %v331
    %v333 = vlaneseq
    %v334 = vshrl.u32 %v333, 7
    %v335 = vsub.s32 1, %v334
    %v336 = vrot.slane %v296, %v335
    %v337 = vmul.f32 %v323, %v332
    %v338 = vmul.f32 %v327, %v336
    %v339 = vadd.f32 %v319, %v337
    %v340 = vadd.f32 %v320, %v338
    %341 = vset.pattern.permute.xlu0 2
    %342 = vperm.xlu0 %341, %v99
    %v343 = vpop.permute.xlu0 %342
    %345 = vset.pattern.permute.xlu0 2
    %346 = vperm.xlu0 %345, %v100
    %v347 = vpop.permute.xlu0 %346
    %v349 = vlaneseq
    %v350 = vshrl.u32 %v349, 7
    %v351 = vsub.s32 2, %v350
    %v352 = vrot.slane %v291, %v351
    %v353 = vlaneseq
    %v354 = vshrl.u32 %v353, 7
    %v355 = vsub.s32 2, %v354
    %v356 = vrot.slane %v296, %v355
    %v357 = vmul.f32 %v343, %v352
    %v358 = vmul.f32 %v347, %v356
    %v359 = vadd.f32 %v339, %v357
    %v360 = vadd.f32 %v340, %v358
    %361 = vset.pattern.permute.xlu0 3
    %362 = vperm.xlu0 %361, %v99
    %v363 = vpop.permute.xlu0 %362
    %365 = vset.pattern.permute.xlu0 3
    %366 = vperm.xlu0 %365, %v100
    %v367 = vpop.permute.xlu0 %366
    %v369 = vlaneseq
    %v370 = vshrl.u32 %v369, 7
    %v371 = vsub.s32 3, %v370
    %v372 = vrot.slane %v291, %v371
    %v373 = vlaneseq
    %v374 = vshrl.u32 %v373, 7
    %v375 = vsub.s32 3, %v374
    %v376 = vrot.slane %v296, %v375
    %v377 = vmul.f32 %v363, %v372
    %v378 = vmul.f32 %v367, %v376
    %v379 = vadd.f32 %v359, %v377
    %v380 = vadd.f32 %v360, %v378
    %381 = vset.pattern.permute.xlu0 4
    %382 = vperm.xlu0 %381, %v99
    %v383 = vpop.permute.xlu0 %382
    %385 = vset.pattern.permute.xlu0 4
    %386 = vperm.xlu0 %385, %v100
    %v387 = vpop.permute.xlu0 %386
    %v389 = vlaneseq
    %v390 = vshrl.u32 %v389, 7
    %v391 = vsub.s32 4, %v390
    %v392 = vrot.slane %v291, %v391
    %v393 = vlaneseq
    %v394 = vshrl.u32 %v393, 7
    %v395 = vsub.s32 4, %v394
    %v396 = vrot.slane %v296, %v395
    %v397 = vmul.f32 %v383, %v392
    %v398 = vmul.f32 %v387, %v396
    %v399 = vadd.f32 %v379, %v397
    %v400 = vadd.f32 %v380, %v398
    %401 = vset.pattern.permute.xlu0 5
    %402 = vperm.xlu0 %401, %v99
    %v403 = vpop.permute.xlu0 %402
    %405 = vset.pattern.permute.xlu0 5
    %406 = vperm.xlu0 %405, %v100
    %v407 = vpop.permute.xlu0 %406
    %v409 = vlaneseq
    %v410 = vshrl.u32 %v409, 7
    %v411 = vsub.s32 5, %v410
    %v412 = vrot.slane %v291, %v411
    %v413 = vlaneseq
    %v414 = vshrl.u32 %v413, 7
    %v415 = vsub.s32 5, %v414
    %v416 = vrot.slane %v296, %v415
    %v417 = vmul.f32 %v403, %v412
    %v418 = vmul.f32 %v407, %v416
    %v419 = vadd.f32 %v399, %v417
    %v420 = vadd.f32 %v400, %v418
    %421 = vset.pattern.permute.xlu0 6
    %422 = vperm.xlu0 %421, %v99
    %v423 = vpop.permute.xlu0 %422
    %425 = vset.pattern.permute.xlu0 6
    %426 = vperm.xlu0 %425, %v100
    %v427 = vpop.permute.xlu0 %426
    %v429 = vlaneseq
    %v430 = vshrl.u32 %v429, 7
    %v431 = vsub.s32 6, %v430
    %v432 = vrot.slane %v291, %v431
    %v433 = vlaneseq
    %v434 = vshrl.u32 %v433, 7
    %v435 = vsub.s32 6, %v434
    %v436 = vrot.slane %v296, %v435
    %v437 = vmul.f32 %v423, %v432
    %v438 = vmul.f32 %v427, %v436
    %v439 = vadd.f32 %v419, %v437
    %v440 = vadd.f32 %v420, %v438
    %441 = vset.pattern.permute.xlu0 7
    %442 = vperm.xlu0 %441, %v99
    %v443 = vpop.permute.xlu0 %442
    %445 = vset.pattern.permute.xlu0 7
    %446 = vperm.xlu0 %445, %v100
    %v447 = vpop.permute.xlu0 %446
    %v449 = vlaneseq
    %v450 = vshrl.u32 %v449, 7
    %v451 = vsub.s32 7, %v450
    %v452 = vrot.slane %v291, %v451
    %v453 = vlaneseq
    %v454 = vshrl.u32 %v453, 7
    %v455 = vsub.s32 7, %v454
    %v456 = vrot.slane %v296, %v455
    %v457 = vmul.f32 %v443, %v452
    %v458 = vmul.f32 %v447, %v456
    %v459 = vadd.f32 %v439, %v457
    %v460 = vadd.f32 %v440, %v458
    %v461 = vadd.f32 %v191, %v459
    %v462 = vadd.f32 %v196, %v460
    %v463 = vadd.f32 %v461, %v95
    %v464 = vadd.f32 %v462, %v96
    %v465 = vtanh.pop %v463
    %v466 = vtanh.pop %v464
    %s467 = scalar_lea.vmem [#allocation8], 128
    %v468 = vld [vmem:[%s467] sm:$0xff]
    %v469 = vld [vmem:[%s467 + $0x8] sm:$0xff]
    %v470 = vld [vmem:[%s467 + $0x10] sm:$0xff]
    %v471 = vld [vmem:[%s467 + $0x18] sm:$0xff]
    %v472 = vld [vmem:[%s467 + $0x20] sm:$0xff]
    %v473 = vld [vmem:[%s467 + $0x28] sm:$0xff]
    %v474 = vld [vmem:[%s467 + $0x30] sm:$0xff]
    %v475 = vld [vmem:[%s467 + $0x38] sm:$0xff]
    %v476 = vld [vmem:[%s467 + $0x40] sm:$0xff]
    %v477 = vld [vmem:[%s467 + $0x48] sm:$0xff]
    %v478 = vld [vmem:[%s467 + $0x50] sm:$0xff]
    %v479 = vld [vmem:[%s467 + $0x58] sm:$0xff]
    %v480 = vld [vmem:[%s467 + $0x60] sm:$0xff]
    %v481 = vld [vmem:[%s467 + $0x68] sm:$0xff]
    %v482 = vld [vmem:[%s467 + $0x70] sm:$0xff]
    %v483 = vld [vmem:[%s467 + $0x78] sm:$0xff]
    %s484 = scalar_lea.vmem %s4, 1
    %v485 = vld [vmem:[%s484] sm:$0x1]
    %v487 = vlaneseq
    %v488 = vshrl.u32 %v487, 7
    %v489 = vsub.s32 0, %v488
    %v490 = vrot.slane %v485, %v489
    %492 = vmatprep.subr.mxu0 0.0
    %493 = vmatpush1.msra.mxu0 %v468
    %494 = vmatprep.subr.mxu0 0.0
    %495 = vmatpush1.msra.mxu0 %v469
    %496 = vmatprep.subr.mxu0 0.0
    %497 = vmatpush1.msra.mxu0 %v470
    %498 = vmatprep.subr.mxu0 0.0
    %499 = vmatpush1.msra.mxu0 %v471
    %500 = vmatprep.subr.mxu0 0.0
    %501 = vmatpush1.msra.mxu0 %v472
    %502 = vmatprep.subr.mxu0 0.0
    %503 = vmatpush1.msra.mxu0 %v473
    %504 = vmatprep.subr.mxu0 0.0
    %505 = vmatpush1.msra.mxu0 %v474
    %506 = vmatprep.subr.mxu0 0.0
    %507 = vmatpush1.msra.mxu0 %v475
    %508 = vmatprep.subr.mxu0 0.0
    %509 = vmatpush1.msra.mxu0 %v476
    %510 = vmatprep.subr.mxu0 0.0
    %511 = vmatpush1.msra.mxu0 %v477
    %512 = vmatprep.subr.mxu0 0.0
    %513 = vmatpush1.msra.mxu0 %v478
    %514 = vmatprep.subr.mxu0 0.0
    %515 = vmatpush1.msra.mxu0 %v479
    %516 = vmatprep.subr.mxu0 0.0
    %517 = vmatpush1.msra.mxu0 %v480
    %518 = vmatprep.subr.mxu0 0.0
    %519 = vmatpush1.msra.mxu0 %v481
    %520 = vmatprep.subr.mxu0 0.0
    %521 = vmatpush1.msra.mxu0 %v482
    %522 = vmatprep.subr.mxu0 0.0
    %523 = vmatpush1.msra.mxu0 %v483
    %524 = vmatprep.subr.mxu0 0.0
    %525 = vmatpush1.msra.mxu0 0.0
    %526 = vmatprep.subr.mxu0 0.0
    %527 = vmatpush1.msra.mxu0 0.0
    %528 = vmatprep.subr.mxu0 0.0
    %529 = vmatpush1.msra.mxu0 0.0
    %530 = vmatprep.subr.mxu0 0.0
    %531 = vmatpush1.msra.mxu0 0.0
    %532 = vmatprep.subr.mxu0 0.0
    %533 = vmatpush1.msra.mxu0 0.0
    %534 = vmatprep.subr.mxu0 0.0
    %535 = vmatpush1.msra.mxu0 0.0
    %536 = vmatprep.subr.mxu0 0.0
    %537 = vmatpush1.msra.mxu0 0.0
    %538 = vmatprep.subr.mxu0 0.0
    %539 = vmatpush1.msra.mxu0 0.0
    %540 = vmatprep.subr.mxu0 0.0
    %541 = vmatpush1.msra.mxu0 0.0
    %542 = vmatprep.subr.mxu0 0.0
    %543 = vmatpush1.msra.mxu0 0.0
    %544 = vmatprep.subr.mxu0 0.0
    %545 = vmatpush1.msra.mxu0 0.0
    %546 = vmatprep.subr.mxu0 0.0
    %547 = vmatpush1.msra.mxu0 0.0
    %548 = vmatprep.subr.mxu0 0.0
    %549 = vmatpush1.msra.mxu0 0.0
    %550 = vmatprep.subr.mxu0 0.0
    %551 = vmatpush1.msra.mxu0 0.0
    %552 = vmatprep.subr.mxu0 0.0
    %553 = vmatpush1.msra.mxu0 0.0
    %554 = vmatprep.subr.mxu0 0.0
    %555 = vmatpush1.msra.mxu0 0.0
    %556 = vmatprep.mubr.f32.mxu0 0.0
    %557 = vmatmul.mubr.f32.gmra.mrb[0].mxu0 %v465
    %v558 = vpop.f32.mrb[0].mxu0
    %v559 = vadd.f32 %v490, %v558
    %v560 = vpop.f32.mrb[0].mxu0
    %561 = vmatprep.mubr.f32.mxu0 0.0
    %562 = vmatmul.mubr.f32.gmra.mrb[0].mxu0 %v466
    %v563 = vpop.f32.mrb[0].mxu0
    %v564 = vadd.f32 %v490, %v563
    %v565 = vpop.f32.mrb[0].mxu0
    %566 = vdwg.mxu0
    %v567 = vmul.f32 %v465, %v97
    %v568 = vmul.f32 %v466, %v98
    %s569 = scalar_lea.vmem [#allocation10], 128
    %v570 = vld [vmem:[%s569] sm:$0xff]
    %v571 = vld [vmem:[%s569 + $0x8] sm:$0xff]
    %v572 = vld [vmem:[%s569 + $0x10] sm:$0xff]
    %v573 = vld [vmem:[%s569 + $0x18] sm:$0xff]
    %v574 = vld [vmem:[%s569 + $0x20] sm:$0xff]
    %v575 = vld [vmem:[%s569 + $0x28] sm:$0xff]
    %v576 = vld [vmem:[%s569 + $0x30] sm:$0xff]
    %v577 = vld [vmem:[%s569 + $0x38] sm:$0xff]
    %v578 = vld [vmem:[%s569 + $0x40] sm:$0xff]
    %v579 = vld [vmem:[%s569 + $0x48] sm:$0xff]
    %v580 = vld [vmem:[%s569 + $0x50] sm:$0xff]
    %v581 = vld [vmem:[%s569 + $0x58] sm:$0xff]
    %v582 = vld [vmem:[%s569 + $0x60] sm:$0xff]
    %v583 = vld [vmem:[%s569 + $0x68] sm:$0xff]
    %v584 = vld [vmem:[%s569 + $0x70] sm:$0xff]
    %v585 = vld [vmem:[%s569 + $0x78] sm:$0xff]
    %s586 = scalar_lea.vmem %s6, 1
    %v587 = vld [vmem:[%s586] sm:$0x1]
    %v589 = vlaneseq
    %v590 = vshrl.u32 %v589, 7
    %v591 = vsub.s32 0, %v590
    %v592 = vrot.slane %v587, %v591
    %594 = vmatprep.subr.mxu0 0.0
    %595 = vmatpush1.msra.mxu0 %v570
    %596 = vmatprep.subr.mxu0 0.0
    %597 = vmatpush1.msra.mxu0 %v571
    %598 = vmatprep.subr.mxu0 0.0
    %599 = vmatpush1.msra.mxu0 %v572
    %600 = vmatprep.subr.mxu0 0.0
    %601 = vmatpush1.msra.mxu0 %v573
    %602 = vmatprep.subr.mxu0 0.0
    %603 = vmatpush1.msra.mxu0 %v574
    %604 = vmatprep.subr.mxu0 0.0
    %605 = vmatpush1.msra.mxu0 %v575
    %606 = vmatprep.subr.mxu0 0.0
    %607 = vmatpush1.msra.mxu0 %v576
    %608 = vmatprep.subr.mxu0 0.0
    %609 = vmatpush1.msra.mxu0 %v577
    %610 = vmatprep.subr.mxu0 0.0
    %611 = vmatpush1.msra.mxu0 %v578
    %612 = vmatprep.subr.mxu0 0.0
    %613 = vmatpush1.msra.mxu0 %v579
    %614 = vmatprep.subr.mxu0 0.0
    %615 = vmatpush1.msra.mxu0 %v580
    %616 = vmatprep.subr.mxu0 0.0
    %617 = vmatpush1.msra.mxu0 %v581
    %618 = vmatprep.subr.mxu0 0.0
    %619 = vmatpush1.msra.mxu0 %v582
    %620 = vmatprep.subr.mxu0 0.0
    %621 = vmatpush1.msra.mxu0 %v583
    %622 = vmatprep.subr.mxu0 0.0
    %623 = vmatpush1.msra.mxu0 %v584
    %624 = vmatprep.subr.mxu0 0.0
    %625 = vmatpush1.msra.mxu0 %v585
    %626 = vmatprep.subr.mxu0 0.0
    %627 = vmatpush1.msra.mxu0 0.0
    %628 = vmatprep.subr.mxu0 0.0
    %629 = vmatpush1.msra.mxu0 0.0
    %630 = vmatprep.subr.mxu0 0.0
    %631 = vmatpush1.msra.mxu0 0.0
    %632 = vmatprep.subr.mxu0 0.0
    %633 = vmatpush1.msra.mxu0 0.0
    %634 = vmatprep.subr.mxu0 0.0
    %635 = vmatpush1.msra.mxu0 0.0
    %636 = vmatprep.subr.mxu0 0.0
    %637 = vmatpush1.msra.mxu0 0.0
    %638 = vmatprep.subr.mxu0 0.0
    %639 = vmatpush1.msra.mxu0 0.0
    %640 = vmatprep.subr.mxu0 0.0
    %641 = vmatpush1.msra.mxu0 0.0
    %642 = vmatprep.subr.mxu0 0.0
    %643 = vmatpush1.msra.mxu0 0.0
    %644 = vmatprep.subr.mxu0 0.0
    %645 = vmatpush1.msra.mxu0 0.0
    %646 = vmatprep.subr.mxu0 0.0
    %647 = vmatpush1.msra.mxu0 0.0
    %648 = vmatprep.subr.mxu0 0.0
    %649 = vmatpush1.msra.mxu0 0.0
    %650 = vmatprep.subr.mxu0 0.0
    %651 = vmatpush1.msra.mxu0 0.0
    %652 = vmatprep.subr.mxu0 0.0
    %653 = vmatpush1.msra.mxu0 0.0
    %654 = vmatprep.subr.mxu0 0.0
    %655 = vmatpush1.msra.mxu0 0.0
    %656 = vmatprep.subr.mxu0 0.0
    %657 = vmatpush1.msra.mxu0 0.0
    %658 = vmatprep.mubr.f32.mxu0 0.0
    %659 = vmatmul.mubr.f32.gmra.mrb[0].mxu0 %v567
    %v660 = vpop.f32.mrb[0].mxu0
    %v661 = vadd.f32 %v592, %v660
    %v662 = vpop.f32.mrb[0].mxu0
    %663 = vmatprep.mubr.f32.mxu0 0.0
    %664 = vmatmul.mubr.f32.gmra.mrb[0].mxu0 %v568
    %v665 = vpop.f32.mrb[0].mxu0
    %v666 = vadd.f32 %v592, %v665
    %v667 = vpop.f32.mrb[0].mxu0
    %668 = vdwg.mxu0
    %v669 = vlaneseq
    %v670 = vshrl.u32 %v669, 7
    %v671 = vsub.s32 0, %v670
    %v672 = vrot.slane %v661, %v671
    %v673 = vlaneseq
    %v674 = vshrl.u32 %v673, 7
    %v675 = vsub.s32 0, %v674
    %v676 = vrot.slane %v666, %v675
    %v677 = vmul.f32 %v302, %v672
    %v678 = vmul.f32 %v307, %v676
    %v679 = vadd.f32 %v677, 0.0
    %v680 = vadd.f32 %v678, 0.0
    %v681 = vlaneseq
    %v682 = vshrl.u32 %v681, 7
    %v683 = vsub.s32 1, %v682
    %v684 = vrot.slane %v661, %v683
    %v685 = vlaneseq
    %v686 = vshrl.u32 %v685, 7
    %v687 = vsub.s32 1, %v686
    %v688 = vrot.slane %v666, %v687
    %v689 = vmul.f32 %v323, %v684
    %v690 = vmul.f32 %v327, %v688
    %v691 = vadd.f32 %v679, %v689
    %v692 = vadd.f32 %v680, %v690
    %v693 = vlaneseq
    %v694 = vshrl.u32 %v693, 7
    %v695 = vsub.s32 2, %v694
    %v696 = vrot.slane %v661, %v695
    %v697 = vlaneseq
    %v698 = vshrl.u32 %v697, 7
    %v699 = vsub.s32 2, %v698
    %v700 = vrot.slane %v666, %v699
    %v701 = vmul.f32 %v343, %v696
    %v702 = vmul.f32 %v347, %v700
    %v703 = vadd.f32 %v691, %v701
    %v704 = vadd.f32 %v692, %v702
    %v705 = vlaneseq
    %v706 = vshrl.u32 %v705, 7
    %v707 = vsub.s32 3, %v706
    %v708 = vrot.slane %v661, %v707
    %v709 = vlaneseq
    %v710 = vshrl.u32 %v709, 7
    %v711 = vsub.s32 3, %v710
    %v712 = vrot.slane %v666, %v711
    %v713 = vmul.f32 %v363, %v708
    %v714 = vmul.f32 %v367, %v712
    %v715 = vadd.f32 %v703, %v713
    %v716 = vadd.f32 %v704, %v714
    %v717 = vlaneseq
    %v718 = vshrl.u32 %v717, 7
    %v719 = vsub.s32 4, %v718
    %v720 = vrot.slane %v661, %v719
    %v721 = vlaneseq
    %v722 = vshrl.u32 %v721, 7
    %v723 = vsub.s32 4, %v722
    %v724 = vrot.slane %v666, %v723
    %v725 = vmul.f32 %v383, %v720
    %v726 = vmul.f32 %v387, %v724
    %v727 = vadd.f32 %v715, %v725
    %v728 = vadd.f32 %v716, %v726
    %v729 = vlaneseq
    %v730 = vshrl.u32 %v729, 7
    %v731 = vsub.s32 5, %v730
    %v732 = vrot.slane %v661, %v731
    %v733 = vlaneseq
    %v734 = vshrl.u32 %v733, 7
    %v735 = vsub.s32 5, %v734
    %v736 = vrot.slane %v666, %v735
    %v737 = vmul.f32 %v403, %v732
    %v738 = vmul.f32 %v407, %v736
    %v739 = vadd.f32 %v727, %v737
    %v740 = vadd.f32 %v728, %v738
    %v741 = vlaneseq
    %v742 = vshrl.u32 %v741, 7
    %v743 = vsub.s32 6, %v742
    %v744 = vrot.slane %v661, %v743
    %v745 = vlaneseq
    %v746 = vshrl.u32 %v745, 7
    %v747 = vsub.s32 6, %v746
    %v748 = vrot.slane %v666, %v747
    %v749 = vmul.f32 %v423, %v744
    %v750 = vmul.f32 %v427, %v748
    %v751 = vadd.f32 %v739, %v749
    %v752 = vadd.f32 %v740, %v750
    %v753 = vlaneseq
    %v754 = vshrl.u32 %v753, 7
    %v755 = vsub.s32 7, %v754
    %v756 = vrot.slane %v661, %v755
    %v757 = vlaneseq
    %v758 = vshrl.u32 %v757, 7
    %v759 = vsub.s32 7, %v758
    %v760 = vrot.slane %v666, %v759
    %v761 = vmul.f32 %v443, %v756
    %v762 = vmul.f32 %v447, %v760
    %v763 = vadd.f32 %v751, %v761
    %v764 = vadd.f32 %v752, %v762
    %v765 = vadd.f32 %v559, %v763
    %v766 = vadd.f32 %v564, %v764
    %v767 = vadd.f32 %v765, %v465
    %v768 = vadd.f32 %v766, %v466
    %v769 = vtanh.pop %v767
    %v770 = vtanh.pop %v768
    %771 = vst [vmem:[#allocation11] sm:$0xff] %v769
    %772 = vst [vmem:[#allocation11 + $0x8] sm:$0xff] %v770
    // Predicated region
    $region50: #{tpu_custom_call.1} parent=1 // pred_check
      _
    $region51: #{tpu_custom_call.1} parent=1 // pred_check_branch
      %774 = sbr.rel (0) target = $region53
    $region52: #{tpu_custom_call.1} parent=1 // pred_region
      %s776 = ssub.s32 256, 256
      %777 = vsyncadd [#allocation4], %s776
      %s778 = sshll.u32 [#allocation11], 4
      %s779 = int_to_ptr.vmem [resolvable:$true] %s778
      %784 = dma.vmem_to_hbm [thread:$0]  %s779, 256, %s7, [#allocation4], 128, 128, 8
    $region53: #{tpu_custom_call.1} parent=1 // pred_fallthru
      _
    // Predicated region
    $region54: #{tpu_custom_call.1} parent=1 // pred_check
      _
    $region55: #{tpu_custom_call.1} parent=1 // pred_check_branch
      %786 = sbr.rel (0) target = $region57
    $region56: #{tpu_custom_call.1} parent=1 // pred_region
      %787 = dma.done [#allocation4], 256
    $region57: #{tpu_custom_call.1} parent=1 // pred_fallthru
      _
    %788 = vsyncpa [#allocation3], 1
    %789 = vsyncpa [#allocation6], 1
    %790 = vsyncpa [#allocation9], 1
    %791 = vsyncpa [#allocation4], 1

</llo_original>
